<compile_context>
chip_gen: v7x
topology: tpu7x:2x2x1
jax: 0.10.0
libtpu: 0.0.40
codegen_flags: <defaults>
</compile_context>

<pallas_src>
import jax
import jax.numpy as jnp
from jax import lax
from jax.experimental import pallas as pl
from jax.experimental.pallas import tpu as pltpu

THRESHOLD = 0.5  # IFNode default threshold
LANE = 128


def _round_up(n, m):
    return ((n + m - 1) // m) * m


def _outer_acc(a, b):
    # a: (tile_n, Din), b: (tile_n, Dout) -> (Din, Dout), contracting over the
    # batch axis of BOTH operands (no explicit transpose materialized).
    return lax.dot_general(
        a, b, (((0,), (0,)), ((), ())), preferred_element_type=jnp.float32)


def three_point_kernel(x_ref, w1_ref, w2_ref, w3_ref,
                       s_ref, dw1_ref, dw2_ref, dw3_ref):
    b = pl.program_id(1)  # inner batch-tile (reduction) axis

    # dw outputs are VMEM-resident accumulators across the inner axis; each
    # batch shard (outer parallel axis) re-initializes its own block at b == 0.
    @pl.when(b == 0)
    def _():
        dw1_ref[...] = jnp.zeros_like(dw1_ref)
        dw2_ref[...] = jnp.zeros_like(dw2_ref)
        dw3_ref[...] = jnp.zeros_like(dw3_ref)

    thr = jnp.float32(THRESHOLD)

    x = x_ref[...]
    # x is spike-valued (0/1) per the module contract ("x 是脉冲"), so the bf16
    # cast used for the dw contraction is bit-exact.
    x_b = x.astype(jnp.bfloat16)

    # --- stage 1: STDP(IFNode, CustomLinear(w1)) ---
    i1 = jnp.dot(x, w1_ref[...], preferred_element_type=jnp.float32)
    s1 = i1 >= thr
    s1_f = s1.astype(jnp.float32)
    s1_b = s1.astype(jnp.bfloat16)
    dw1_ref[...] += _outer_acc(x_b, s1_b)

    # --- stage 2: STDP(IFNode, CustomLinear(w2)) ---
    i2 = jnp.dot(s1_f, w2_ref[...], preferred_element_type=jnp.float32)
    s2 = i2 >= thr
    s2_f = s2.astype(jnp.float32)
    s2_b = s2.astype(jnp.bfloat16)
    dw2_ref[...] += _outer_acc(s1_b, s2_b)

    # --- stage 3: STDP(IFNode, CustomLinear(w3)) ---
    i3 = jnp.dot(s2_f, w3_ref[...], preferred_element_type=jnp.float32)
    s3 = i3 >= thr
    s3_b = s3.astype(jnp.bfloat16)
    dw3_ref[...] += _outer_acc(s2_b, s3_b)

    s_ref[...] = s3.astype(s_ref.dtype)


def three_point_forward(x, w1, w2, w3, *, tile_n=128, num_shards=2):
    N, D0 = x.shape
    D0w, D1 = w1.shape
    D1w, D2 = w2.shape
    D2w, D3 = w3.shape
    assert D0 == D0w and D1 == D1w and D2 == D2w

    # Lane-dense padding: feature dims up to multiples of 128 (zero padding is
    # semantics-preserving: padded inputs/weights are 0 -> padded i == 0 < thr
    # -> padded spikes == 0 -> padded dw entries == 0).
    D0p, D1p, D2p, D3p = (_round_up(d, LANE) for d in (D0, D1, D2, D3))

    # Don't create more batch shards than there are batch tiles of work.
    num_shards = max(1, min(num_shards, -(-N // tile_n)))

    # Conservative VMEM estimate (double-buffered x / s tiles, resident weights
    # counted twice, resident dw accumulators). Shrink tile_n if over budget.
    def _vmem_est(tn):
        f32 = 4
        w_bytes = (D0p * D1p + D1p * D2p + D2p * D3p) * f32
        return (2 * tn * D0p * f32 + 2 * tn * D3p * f32 + 2 * w_bytes + 2 * w_bytes)

    VMEM_BUDGET = 40 << 20  # leave headroom under v7x's 64 MiB physical VMEM
    while tile_n > 8 and _vmem_est(tile_n) > VMEM_BUDGET:
        tile_n //= 2
    vmem_limit = int(min(max(int(1.25 * _vmem_est(tile_n)), 32 << 20), 56 << 20))

    Np = _round_up(N, num_shards * tile_n)
    inner = Np // (num_shards * tile_n)

    f32 = jnp.float32
    xp = jnp.zeros((Np, D0p), f32).at[:N, :D0].set(x.astype(f32))
    w1p = jnp.zeros((D0p, D1p), f32).at[:D0, :D1].set(w1.astype(f32))
    w2p = jnp.zeros((D1p, D2p), f32).at[:D1, :D2].set(w2.astype(f32))
    w3p = jnp.zeros((D2p, D3p), f32).at[:D2, :D3].set(w3.astype(f32))

    out_shape = (
        jax.ShapeDtypeStruct((Np, D3p), f32),                 # s3 spikes (padded)
        jax.ShapeDtypeStruct((num_shards, D0p, D1p), f32),    # per-shard dw1
        jax.ShapeDtypeStruct((num_shards, D1p, D2p), f32),    # per-shard dw2
        jax.ShapeDtypeStruct((num_shards, D2p, D3p), f32),    # per-shard dw3
    )

    grid_spec = pltpu.PrefetchScalarGridSpec(
        num_scalar_prefetch=0,
        grid=(num_shards, inner),
        in_specs=[
            pl.BlockSpec((tile_n, D0p), lambda c, b: (c * inner + b, 0)),  # x tile
            pl.BlockSpec((D0p, D1p), lambda c, b: (0, 0)),                 # w1 resident
            pl.BlockSpec((D1p, D2p), lambda c, b: (0, 0)),                 # w2 resident
            pl.BlockSpec((D2p, D3p), lambda c, b: (0, 0)),                 # w3 resident
        ],
        out_specs=[
            pl.BlockSpec((tile_n, D3p), lambda c, b: (c * inner + b, 0)),  # spikes
            pl.BlockSpec((None, D0p, D1p), lambda c, b: (c, 0, 0)),        # dw1 acc
            pl.BlockSpec((None, D1p, D2p), lambda c, b: (c, 0, 0)),        # dw2 acc
            pl.BlockSpec((None, D2p, D3p), lambda c, b: (c, 0, 0)),        # dw3 acc
        ],
    )

    s3p, dw1p, dw2p, dw3p = pl.pallas_call(
        three_point_kernel,
        out_shape=out_shape,
        grid_spec=grid_spec,
        compiler_params=pltpu.CompilerParams(
            # outer axis: batch shards across TensorCores (megacore on v7x);
            # inner axis: reduction for the dw accumulators -> "arbitrary".
            dimension_semantics=("parallel", "arbitrary"),
            vmem_limit_bytes=vmem_limit,
        ),
    )(xp, w1p, w2p, w3p)

    s3 = s3p[:N, :D3]
    dw1 = dw1p.sum(axis=0)[:D0, :D1]
    dw2 = dw2p.sum(axis=0)[:D1, :D2]
    dw3 = dw3p.sum(axis=0)[:D2, :D3]
    return s3, dw1, dw2, dw3


def three_point_forward_ref(x, w1, w2, w3):
    """Pure-JAX reference of the PyTorch forward."""
    thr = jnp.float32(THRESHOLD)
    i1 = x @ w1
    s1 = (i1 >= thr).astype(jnp.float32)
    dw1 = x.T @ s1
    i2 = s1 @ w2
    s2 = (i2 >= thr).astype(jnp.float32)
    dw2 = s1.T @ s2
    i3 = s2 @ w3
    s3 = (i3 >= thr).astype(jnp.float32)
    dw3 = s2.T @ s3
    return s3, dw1, dw2, dw3


if __name__ == "__main__":
    key = jax.random.PRNGKey(0)
    k_x, k1, k2, k3 = jax.random.split(key, 4)

    # Small but hardware-relevant shapes; non-128-multiple feature dims
    # exercise the lane-dense padding / slicing path.
    N, D0, D1, D2, D3 = 256, 100, 128, 80, 96

    # Binary input spikes; weights quantized to multiples of 1/64 so every
    # matmul precision path gives bit-identical spike decisions.
    x = (jax.random.uniform(k_x, (N, D0)) > 0.5).astype(jnp.float32)
    w1 = jnp.floor(jax.random.uniform(k1, (D0, D1)) * 8.0) / 64.0
    w2 = jnp.floor(jax.random.uniform(k2, (D1, D2)) * 8.0) / 64.0
    w3 = jnp.floor(jax.random.uniform(k3, (D2, D3)) * 8.0) / 64.0

    s3, dw1, dw2, dw3 = jax.block_until_ready(three_point_forward(x, w1, w2, w3))

    # Correctness check against pure-JAX reference.
    s3_r, dw1_r, dw2_r, dw3_r = three_point_forward_ref(x, w1, w2, w3)
    assert jnp.array_equal(s3, s3_r), "spike mismatch"
    assert jnp.allclose(dw1, dw1_r, atol=1e-5), "dw1 mismatch"
    assert jnp.allclose(dw2, dw2_r, atol=1e-5), "dw2 mismatch"
    assert jnp.allclose(dw3, dw3_r, atol=1e-5), "dw3 mismatch"

    print("KERNEL_OK")
</pallas_src>

<mosaic_0001>
module attributes {stable_mosaic.version = 11 : i64} {
  func.func @three_point_kernel(%arg0: i32, %arg1: i32, %arg2: memref<128x128xf32, #tpu.memory_space<vmem>>, %arg3: memref<128x128xf32, #tpu.memory_space<vmem>>, %arg4: memref<128x128xf32, #tpu.memory_space<vmem>>, %arg5: memref<128x128xf32, #tpu.memory_space<vmem>>, %arg6: memref<128x128xf32, #tpu.memory_space<vmem>>, %arg7: memref<1x128x128xf32, #tpu.memory_space<vmem>>, %arg8: memref<1x128x128xf32, #tpu.memory_space<vmem>>, %arg9: memref<1x128x128xf32, #tpu.memory_space<vmem>>) attributes {dimension_semantics = [#tpu.dimension_semantics<parallel>, #tpu.dimension_semantics<arbitrary>], iteration_bounds = array<i64: 2, 1>, scalar_prefetch = 0 : i64, scratch_operands = 0 : i64, tpu.core_type = #tpu.core_type<tc>, window_params = [{transform_indices = @transform_0, window_bounds = array<i64: 128, 128>}, {pipeline_mode = #tpu.pipeline_mode<synchronous>, transform_indices = @transform_1, window_bounds = array<i64: 128, 128>}, {pipeline_mode = #tpu.pipeline_mode<synchronous>, transform_indices = @transform_2, window_bounds = array<i64: 128, 128>}, {pipeline_mode = #tpu.pipeline_mode<synchronous>, transform_indices = @transform_3, window_bounds = array<i64: 128, 128>}, {transform_indices = @transform_4, window_bounds = array<i64: 128, 128>}, {transform_indices = @transform_5, window_bounds = array<i64: 1, 128, 128>}, {transform_indices = @transform_6, window_bounds = array<i64: 1, 128, 128>}, {transform_indices = @transform_7, window_bounds = array<i64: 1, 128, 128>}]} {
    %c0_i32 = arith.constant 0 : i32
    %0 = arith.cmpi eq, %arg1, %c0_i32 : i32
    %1 = arith.extui %0 : i1 to i32
    %c0_i32_0 = arith.constant 0 : i32
    %2 = arith.cmpi ne, %1, %c0_i32_0 : i32
    scf.if %2 {
      %cst_36 = arith.constant 0.000000e+00 : f32
      %54 = vector.broadcast %cst_36 : f32 to vector<128x128xf32>
      %c0_37 = arith.constant 0 : index
      %c0_38 = arith.constant 0 : index
      %c0_39 = arith.constant 0 : index
      %55 = vector.load %arg7[%c0_37, %c0_38, %c0_39] : memref<1x128x128xf32, #tpu.memory_space<vmem>>, vector<1x128x128xf32>
      %56 = vector.shape_cast %55 : vector<1x128x128xf32> to vector<128x128xf32>
      %57 = vector.shape_cast %54 : vector<128x128xf32> to vector<1x128x128xf32>
      tpu.vector_store %arg7[%c0_37, %c0_38, %c0_39], %57 {strides = array<i32>} : memref<1x128x128xf32, #tpu.memory_space<vmem>>, vector<1x128x128xf32>,
      %cst_40 = arith.constant 0.000000e+00 : f32
      %58 = vector.broadcast %cst_40 : f32 to vector<128x128xf32>
      %c0_41 = arith.constant 0 : index
      %c0_42 = arith.constant 0 : index
      %c0_43 = arith.constant 0 : index
      %59 = vector.load %arg8[%c0_41, %c0_42, %c0_43] : memref<1x128x128xf32, #tpu.memory_space<vmem>>, vector<1x128x128xf32>
      %60 = vector.shape_cast %59 : vector<1x128x128xf32> to vector<128x128xf32>
      %61 = vector.shape_cast %58 : vector<128x128xf32> to vector<1x128x128xf32>
      tpu.vector_store %arg8[%c0_41, %c0_42, %c0_43], %61 {strides = array<i32>} : memref<1x128x128xf32, #tpu.memory_space<vmem>>, vector<1x128x128xf32>,
      %cst_44 = arith.constant 0.000000e+00 : f32
      %62 = vector.broadcast %cst_44 : f32 to vector<128x128xf32>
      %c0_45 = arith.constant 0 : index
      %c0_46 = arith.constant 0 : index
      %c0_47 = arith.constant 0 : index
      %63 = vector.load %arg9[%c0_45, %c0_46, %c0_47] : memref<1x128x128xf32, #tpu.memory_space<vmem>>, vector<1x128x128xf32>
      %64 = vector.shape_cast %63 : vector<1x128x128xf32> to vector<128x128xf32>
      %65 = vector.shape_cast %62 : vector<128x128xf32> to vector<1x128x128xf32>
      tpu.vector_store %arg9[%c0_45, %c0_46, %c0_47], %65 {strides = array<i32>} : memref<1x128x128xf32, #tpu.memory_space<vmem>>, vector<1x128x128xf32>,
    } else {
    }
    %c0 = arith.constant 0 : index
    %c0_1 = arith.constant 0 : index
    %3 = vector.load %arg2[%c0, %c0_1] : memref<128x128xf32, #tpu.memory_space<vmem>>, vector<128x128xf32>
    %4 = arith.truncf %3 : vector<128x128xf32> to vector<128x128xbf16>
    %c0_2 = arith.constant 0 : index
    %c0_3 = arith.constant 0 : index
    %5 = vector.load %arg3[%c0_2, %c0_3] : memref<128x128xf32, #tpu.memory_space<vmem>>, vector<128x128xf32>
    %cst = arith.constant dense<0.000000e+00> : vector<128x128xf32>
    %6 = tpu.matmul %3, %5, %cst {dimension_numbers = #tpu.dot_dimension_numbers<[1], [0], [0], [1], [0, 0, 1, 1], [], []>} : vector<128x128xf32>, vector<128x128xf32>, vector<128x128xf32> -> vector<128x128xf32>
    %cst_4 = arith.constant 5.000000e-01 : f32
    %7 = vector.broadcast %cst_4 : f32 to vector<128x128xf32>
    %8 = arith.cmpf oge, %6, %7 : vector<128x128xf32>
    %9 = arith.extui %8 : vector<128x128xi1> to vector<128x128xi32>
    %10 = arith.sitofp %9 : vector<128x128xi32> to vector<128x128xf32>
    %11 = arith.extui %8 : vector<128x128xi1> to vector<128x128xi32>
    %12 = arith.sitofp %11 : vector<128x128xi32> to vector<128x128xf32>
    %13 = arith.truncf %12 : vector<128x128xf32> to vector<128x128xbf16>
    %c0_5 = arith.constant 0 : index
    %c0_6 = arith.constant 0 : index
    %c0_7 = arith.constant 0 : index
    %14 = vector.load %arg7[%c0_5, %c0_6, %c0_7] : memref<1x128x128xf32, #tpu.memory_space<vmem>>, vector<1x128x128xf32>
    %15 = vector.shape_cast %14 : vector<1x128x128xf32> to vector<128x128xf32>
    %cst_8 = arith.constant dense<0.000000e+00> : vector<128x128xf32>
    %16 = tpu.matmul %4, %13, %cst_8 {dimension_numbers = #tpu.dot_dimension_numbers<[0], [0], [1], [1], [0, 1, 1, 1], [], []>} : vector<128x128xbf16>, vector<128x128xbf16>, vector<128x128xf32> -> vector<128x128xf32>
    %17 = arith.addf %15, %16 : vector<128x128xf32>
    %c0_9 = arith.constant 0 : index
    %c0_10 = arith.constant 0 : index
    %c0_11 = arith.constant 0 : index
    %18 = vector.load %arg7[%c0_9, %c0_10, %c0_11] : memref<1x128x128xf32, #tpu.memory_space<vmem>>, vector<1x128x128xf32>
    %19 = vector.shape_cast %18 : vector<1x128x128xf32> to vector<128x128xf32>
    %20 = vector.shape_cast %17 : vector<128x128xf32> to vector<1x128x128xf32>
    tpu.vector_store %arg7[%c0_9, %c0_10, %c0_11], %20 {strides = array<i32>} : memref<1x128x128xf32, #tpu.memory_space<vmem>>, vector<1x128x128xf32>,
    %c0_12 = arith.constant 0 : index
    %c0_13 = arith.constant 0 : index
    %21 = vector.load %arg4[%c0_12, %c0_13] : memref<128x128xf32, #tpu.memory_space<vmem>>, vector<128x128xf32>
    %cst_14 = arith.constant dense<0.000000e+00> : vector<128x128xf32>
    %22 = tpu.matmul %10, %21, %cst_14 {dimension_numbers = #tpu.dot_dimension_numbers<[1], [0], [0], [1], [0, 0, 1, 1], [], []>} : vector<128x128xf32>, vector<128x128xf32>, vector<128x128xf32> -> vector<128x128xf32>
    %cst_15 = arith.constant 5.000000e-01 : f32
    %23 = vector.broadcast %cst_15 : f32 to vector<128x128xf32>
    %24 = arith.cmpf oge, %22, %23 : vector<128x128xf32>
    %25 = arith.extui %24 : vector<128x128xi1> to vector<128x128xi32>
    %26 = arith.sitofp %25 : vector<128x128xi32> to vector<128x128xf32>
    %27 = arith.extui %24 : vector<128x128xi1> to vector<128x128xi32>
    %28 = arith.sitofp %27 : vector<128x128xi32> to vector<128x128xf32>
    %29 = arith.truncf %28 : vector<128x128xf32> to vector<128x128xbf16>
    %c0_16 = arith.constant 0 : index
    %c0_17 = arith.constant 0 : index
    %c0_18 = arith.constant 0 : index
    %30 = vector.load %arg8[%c0_16, %c0_17, %c0_18] : memref<1x128x128xf32, #tpu.memory_space<vmem>>, vector<1x128x128xf32>
    %31 = vector.shape_cast %30 : vector<1x128x128xf32> to vector<128x128xf32>
    %cst_19 = arith.constant dense<0.000000e+00> : vector<128x128xf32>
    %32 = tpu.matmul %13, %29, %cst_19 {dimension_numbers = #tpu.dot_dimension_numbers<[0], [0], [1], [1], [0, 1, 1, 1], [], []>} : vector<128x128xbf16>, vector<128x128xbf16>, vector<128x128xf32> -> vector<128x128xf32>
    %33 = arith.addf %31, %32 : vector<128x128xf32>
    %c0_20 = arith.constant 0 : index
    %c0_21 = arith.constant 0 : index
    %c0_22 = arith.constant 0 : index
    %34 = vector.load %arg8[%c0_20, %c0_21, %c0_22] : memref<1x128x128xf32, #tpu.memory_space<vmem>>, vector<1x128x128xf32>
    %35 = vector.shape_cast %34 : vector<1x128x128xf32> to vector<128x128xf32>
    %36 = vector.shape_cast %33 : vector<128x128xf32> to vector<1x128x128xf32>
    tpu.vector_store %arg8[%c0_20, %c0_21, %c0_22], %36 {strides = array<i32>} : memref<1x128x128xf32, #tpu.memory_space<vmem>>, vector<1x128x128xf32>,
    %c0_23 = arith.constant 0 : index
    %c0_24 = arith.constant 0 : index
    %37 = vector.load %arg5[%c0_23, %c0_24] : memref<128x128xf32, #tpu.memory_space<vmem>>, vector<128x128xf32>
    %cst_25 = arith.constant dense<0.000000e+00> : vector<128x128xf32>
    %38 = tpu.matmul %26, %37, %cst_25 {dimension_numbers = #tpu.dot_dimension_numbers<[1], [0], [0], [1], [0, 0, 1, 1], [], []>} : vector<128x128xf32>, vector<128x128xf32>, vector<128x128xf32> -> vector<128x128xf32>
    %cst_26 = arith.constant 5.000000e-01 : f32
    %39 = vector.broadcast %cst_26 : f32 to vector<128x128xf32>
    %40 = arith.cmpf oge, %38, %39 : vector<128x128xf32>
    %41 = arith.extui %40 : vector<128x128xi1> to vector<128x128xi32>
    %42 = arith.sitofp %41 : vector<128x128xi32> to vector<128x128xf32>
    %43 = arith.truncf %42 : vector<128x128xf32> to vector<128x128xbf16>
    %c0_27 = arith.constant 0 : index
    %c0_28 = arith.constant 0 : index
    %c0_29 = arith.constant 0 : index
    %44 = vector.load %arg9[%c0_27, %c0_28, %c0_29] : memref<1x128x128xf32, #tpu.memory_space<vmem>>, vector<1x128x128xf32>
    %45 = vector.shape_cast %44 : vector<1x128x128xf32> to vector<128x128xf32>
    %cst_30 = arith.constant dense<0.000000e+00> : vector<128x128xf32>
    %46 = tpu.matmul %29, %43, %cst_30 {dimension_numbers = #tpu.dot_dimension_numbers<[0], [0], [1], [1], [0, 1, 1, 1], [], []>} : vector<128x128xbf16>, vector<128x128xbf16>, vector<128x128xf32> -> vector<128x128xf32>
    %47 = arith.addf %45, %46 : vector<128x128xf32>
    %c0_31 = arith.constant 0 : index
    %c0_32 = arith.constant 0 : index
    %c0_33 = arith.constant 0 : index
    %48 = vector.load %arg9[%c0_31, %c0_32, %c0_33] : memref<1x128x128xf32, #tpu.memory_space<vmem>>, vector<1x128x128xf32>
    %49 = vector.shape_cast %48 : vector<1x128x128xf32> to vector<128x128xf32>
    %50 = vector.shape_cast %47 : vector<128x128xf32> to vector<1x128x128xf32>
    tpu.vector_store %arg9[%c0_31, %c0_32, %c0_33], %50 {strides = array<i32>} : memref<1x128x128xf32, #tpu.memory_space<vmem>>, vector<1x128x128xf32>,
    %51 = arith.extui %40 : vector<128x128xi1> to vector<128x128xi32>
    %52 = arith.sitofp %51 : vector<128x128xi32> to vector<128x128xf32>
    %c0_34 = arith.constant 0 : index
    %c0_35 = arith.constant 0 : index
    %53 = vector.load %arg6[%c0_34, %c0_35] : memref<128x128xf32, #tpu.memory_space<vmem>>, vector<128x128xf32>
    tpu.vector_store %arg6[%c0_34, %c0_35], %52 {strides = array<i32>} : memref<128x128xf32, #tpu.memory_space<vmem>>, vector<128x128xf32>,
    return
  }
  func.func @transform_0(%arg0: i32, %arg1: i32) -> (i32, i32) {
    %c1_i32 = arith.constant 1 : i32
    %0 = arith.muli %arg0, %c1_i32 : i32
    %1 = arith.addi %0, %arg1 : i32
    %c0_i32 = arith.constant 0 : i32
    %c0_i32_0 = arith.constant 0 : i32
    return %1, %c0_i32 : i32, i32
  }
  func.func @transform_1(%arg0: i32, %arg1: i32) -> (i32, i32) {
    %c0_i32 = arith.constant 0 : i32
    %c0_i32_0 = arith.constant 0 : i32
    %c0_i32_1 = arith.constant 0 : i32
    return %c0_i32, %c0_i32_0 : i32, i32
  }
  func.func @transform_2(%arg0: i32, %arg1: i32) -> (i32, i32) {
    %c0_i32 = arith.constant 0 : i32
    %c0_i32_0 = arith.constant 0 : i32
    %c0_i32_1 = arith.constant 0 : i32
    return %c0_i32, %c0_i32_0 : i32, i32
  }
  func.func @transform_3(%arg0: i32, %arg1: i32) -> (i32, i32) {
    %c0_i32 = arith.constant 0 : i32
    %c0_i32_0 = arith.constant 0 : i32
    %c0_i32_1 = arith.constant 0 : i32
    return %c0_i32, %c0_i32_0 : i32, i32
  }
  func.func @transform_4(%arg0: i32, %arg1: i32) -> (i32, i32) {
    %c1_i32 = arith.constant 1 : i32
    %0 = arith.muli %arg0, %c1_i32 : i32
    %1 = arith.addi %0, %arg1 : i32
    %c0_i32 = arith.constant 0 : i32
    %c0_i32_0 = arith.constant 0 : i32
    return %1, %c0_i32 : i32, i32
  }
  func.func @transform_5(%arg0: i32, %arg1: i32) -> (i32, i32, i32) {
    %c0_i32 = arith.constant 0 : i32
    %c0_i32_0 = arith.constant 0 : i32
    %c0_i32_1 = arith.constant 0 : i32
    return %arg0, %c0_i32, %c0_i32_0 : i32, i32, i32
  }
  func.func @transform_6(%arg0: i32, %arg1: i32) -> (i32, i32, i32) {
    %c0_i32 = arith.constant 0 : i32
    %c0_i32_0 = arith.constant 0 : i32
    %c0_i32_1 = arith.constant 0 : i32
    return %arg0, %c0_i32, %c0_i32_0 : i32, i32, i32
  }
  func.func @transform_7(%arg0: i32, %arg1: i32) -> (i32, i32, i32) {
    %c0_i32 = arith.constant 0 : i32
    %c0_i32_0 = arith.constant 0 : i32
    %c0_i32_1 = arith.constant 0 : i32
    return %arg0, %c0_i32, %c0_i32_0 : i32, i32, i32
  }
}

</mosaic_0001>

<llo_original>
// kernel: tpu_custom_call.1
$region0: #{tpu_custom_call.1}
  #allocation0 [shape = 'u32[]', space=smem, size = 0x4, offset = 0x4, fixed_abs, tag = 'smem constant byte address 0x4 - core index']
  #allocation1 [shape = 'u32[144,128]{1,0:T(1,128)}', space=vmem, size = 0x12000, scoped, tag = 'internal scratch']
  %s0 = inlined_call_operand.hbm [shape: f32[256,128], index: 0, kind: input, shape index: {}]
  %s1 = inlined_call_operand.hbm [shape: f32[128,128], index: 1, kind: input, shape index: {}]
  %s2 = inlined_call_operand.hbm [shape: f32[128,128], index: 2, kind: input, shape index: {}]
  %s3 = inlined_call_operand.hbm [shape: f32[128,128], index: 3, kind: input, shape index: {}]
  %s4 = inlined_call_operand.hbm [shape: f32[256,128], index: 4, kind: output, shape index: {0}]
  %s5 = inlined_call_operand.hbm [shape: f32[2,128,128], index: 5, kind: output, shape index: {1}]
  %s6 = inlined_call_operand.hbm [shape: f32[2,128,128], index: 6, kind: output, shape index: {2}]
  %s7 = inlined_call_operand.hbm [shape: f32[2,128,128], index: 7, kind: output, shape index: {3}]
  %8 = xla_tuple %s4, %s5, %s6, %s7
  %s9 = sld [smem:[#allocation0]]
  $region93: #{tpu_custom_call.1} parent=0
    _
  %s11 = ssub.s32 1, %s9
  %s12 = scalar_select 0, %s11, %s9
  $region1: #{tpu_custom_call.1} parent=0
    #allocation2 [shape = 'u8[131072]{0}', space=vmem, size = 0x20000, scoped, tag = 'input window, operand 0']
    #allocation3 [shape = 's32[2]{0}', space=sflag, size = 0x8, scoped, tag = 'scoped memory for tpu_custom_call.1']
    #allocation4 [shape = 's32[2]{0}', space=sflag, size = 0x8, scoped, tag = 'scoped memory for tpu_custom_call.1']
    #allocation5 [shape = 'u8[65536]{0}', space=vmem, size = 0x10000, scoped, tag = 'input window, operand 1, single buffered']
    #allocation6 [shape = 's32[1]{0}', space=sflag, size = 0x4, scoped, tag = 'scoped memory for tpu_custom_call.1']
    #allocation7 [shape = 'u8[65536]{0}', space=vmem, size = 0x10000, scoped, tag = 'input window, operand 2, single buffered']
    #allocation8 [shape = 'u8[65536]{0}', space=vmem, size = 0x10000, scoped, tag = 'input window, operand 3, single buffered']
    #allocation9 [shape = 's32[1]{0}', space=sflag, size = 0x4, scoped, tag = 'scoped memory for tpu_custom_call.1']
    #allocation10 [shape = 'u8[131072]{0}', space=vmem, size = 0x20000, scoped, tag = 'output window, operand 0']
    #allocation11 [shape = 'u8[131072]{0}', space=vmem, size = 0x20000, scoped, tag = 'output window, operand 1']
    #allocation12 [shape = 's32[2]{0}', space=sflag, size = 0x8, scoped, tag = 'scoped memory for tpu_custom_call.1']
    #allocation13 [shape = 'u8[131072]{0}', space=vmem, size = 0x20000, scoped, tag = 'output window, operand 2']
    #allocation14 [shape = 'u8[131072]{0}', space=vmem, size = 0x20000, scoped, tag = 'output window, operand 3']
    #allocation15 [shape = 's32[2]{0}', space=sflag, size = 0x8, scoped, tag = 'scoped memory for tpu_custom_call.1']
    %13 = vsyncpa [#allocation3], 0
    %s14 = scalar_lea.sflag [#allocation3], 1
    %15 = vsyncpa %s14, 0
    %16 = vsyncpa [#allocation6], 0
    %17 = vsyncpa [#allocation9], 0
    %18 = vsyncpa [#allocation4], 0
    %s19 = scalar_lea.sflag [#allocation4], 1
    %20 = vsyncpa %s19, 0
    %21 = vsyncpa [#allocation12], 0
    %s22 = scalar_lea.sflag [#allocation12], 1
    %23 = vsyncpa %s22, 0
    %24 = vsyncpa [#allocation15], 0
    %s25 = scalar_lea.sflag [#allocation15], 1
    %26 = vsyncpa %s25, 0
    loop: start=0, step=1, limit=4
    $region2: #{tpu_custom_call.1} parent=1 // loop_pre_header
      _
    $region3: #{tpu_custom_call.1} parent=1 // loop_header
      %s28 = sphi 0, %s32
      %p29 = scmp.ge.s32.totalorder %s28, 4
      %s35 = sphi 0, %s47
      %s36 = sphi 0, %s43
      %s37 = sphi 0, %s35
      %s38 = sphi 0, %s36
      %s39 = sphi 0, %s37
      %s40 = sphi 0, %s38
      %s52 = sphi 0, %s54
      %s55 = sphi 0, %s52
      %s56 = sphi 0, %s55
      %s72 = sphi 0, %s56
      %s76 = sphi 0, %s76
      %s78 = sphi 0, %s76
      %s79 = sphi 0, %s78
      %s93 = sphi 0, %s79
      %s97 = sphi 0, %s97
      %s99 = sphi 0, %s97
      %s100 = sphi 0, %s99
      %s114 = sphi 0, %s100
      %s118 = sphi 0, %s118
      %s120 = sphi 0, %s118
      %s121 = sphi 0, %s120
      %s135 = sphi 0, %s121
      %s143 = sphi 0, %s145
      %s146 = sphi 0, %s143
      %s147 = sphi 0, %s146
      %s163 = sphi 0, %s147
      %s169 = sphi 0, %s171
      %s172 = sphi 0, %s169
      %s173 = sphi 0, %s172
      %s189 = sphi 0, %s173
      %s195 = sphi 0, %s197
      %s198 = sphi 0, %s195
      %s199 = sphi 0, %s198
      %s215 = sphi 0, %s199
      %s221 = sphi 0, %s223
      %s224 = sphi 0, %s221
      %s225 = sphi 0, %s224
      %s241 = sphi 0, %s225
    $region4: #{tpu_custom_call.1} parent=1 // loop_header_branch
      %31 = sbr.rel (%p29) target = $region8
    $region5: #{tpu_custom_call.1} parent=1 // loop_body
      %s33 = ssub.s32 %s28, 1
      %s34 = ssub.s32 %s28, 2
      %s41 = sadd.s32 1, %s36
      %p42 = scmp.ge.s32.totalorder %s41, 1
      %s43 = scalar_select %p42, 0, %s41
      %s44 = sadd.s32 1, %s35
      %s45 = scalar_select %p42, %s44, %s35
      %p46 = scmp.ge.s32.totalorder %s45, 2
      %s47 = scalar_select %p46, 0, %s45
      %s48 = sadd.s32 %s35, %s36
      %s49 = sadd.s32 %s47, %s43
      %s50 = ssub.s32 %s48, %s49
      %p51 = scmp.eq.s32.totalorder %s50, 0
      %s53 = sadd.s32 %s52, 1
      %s54 = scalar_select %p51, %s52, %s53
      %p57 = pneg %p51
      %p58 = scmp.eq.s32.totalorder %s28, 1
      %p59 = por %p57, %p58
      %p60 = scmp.ne.s32.totalorder %s52, %s55
      %p61 = scmp.eq.s32.totalorder %s28, 0
      %p62 = por %p60, %p61
      %p63 = scmp.ne.s32.totalorder %s52, %s55
      %p64 = scmp.eq.s32.totalorder %s33, 1
      %p65 = por %p63, %p64
      %p66 = scmp.ne.s32.totalorder %s55, %s56
      %p67 = scmp.eq.s32.totalorder %s33, 0
      %p68 = por %p66, %p67
      %p69 = scmp.ne.s32.totalorder %s55, %s56
      %p70 = scmp.eq.s32.totalorder %s34, 1
      %p71 = por %p69, %p70
      %p73 = scmp.ne.s32.totalorder %s56, %s72
      %p74 = scmp.eq.s32.totalorder %s34, 0
      %p75 = por %p73, %p74
      %s77 = sadd.s32 %s76, 1
      %p80 = scmp.eq.s32.totalorder %s28, 1
      %p81 = scmp.ne.s32.totalorder %s76, %s78
      %p82 = scmp.eq.s32.totalorder %s28, 0
      %p83 = por %p81, %p82
      %p84 = scmp.ne.s32.totalorder %s76, %s78
      %p85 = scmp.eq.s32.totalorder %s33, 1
      %p86 = por %p84, %p85
      %p87 = scmp.ne.s32.totalorder %s78, %s79
      %p88 = scmp.eq.s32.totalorder %s33, 0
      %p89 = por %p87, %p88
      %p90 = scmp.ne.s32.totalorder %s78, %s79
      %p91 = scmp.eq.s32.totalorder %s34, 1
      %p92 = por %p90, %p91
      %p94 = scmp.ne.s32.totalorder %s79, %s93
      %p95 = scmp.eq.s32.totalorder %s34, 0
      %p96 = por %p94, %p95
      %s98 = sadd.s32 %s97, 1
      %p101 = scmp.eq.s32.totalorder %s28, 1
      %p102 = scmp.ne.s32.totalorder %s97, %s99
      %p103 = scmp.eq.s32.totalorder %s28, 0
      %p104 = por %p102, %p103
      %p105 = scmp.ne.s32.totalorder %s97, %s99
      %p106 = scmp.eq.s32.totalorder %s33, 1
      %p107 = por %p105, %p106
      %p108 = scmp.ne.s32.totalorder %s99, %s100
      %p109 = scmp.eq.s32.totalorder %s33, 0
      %p110 = por %p108, %p109
      %p111 = scmp.ne.s32.totalorder %s99, %s100
      %p112 = scmp.eq.s32.totalorder %s34, 1
      %p113 = por %p111, %p112
      %p115 = scmp.ne.s32.totalorder %s100, %s114
      %p116 = scmp.eq.s32.totalorder %s34, 0
      %p117 = por %p115, %p116
      %s119 = sadd.s32 %s118, 1
      %p122 = scmp.eq.s32.totalorder %s28, 1
      %p123 = scmp.ne.s32.totalorder %s118, %s120
      %p124 = scmp.eq.s32.totalorder %s28, 0
      %p125 = por %p123, %p124
      %p126 = scmp.ne.s32.totalorder %s118, %s120
      %p127 = scmp.eq.s32.totalorder %s33, 1
      %p128 = por %p126, %p127
      %p129 = scmp.ne.s32.totalorder %s120, %s121
      %p130 = scmp.eq.s32.totalorder %s33, 0
      %p131 = por %p129, %p130
      %p132 = scmp.ne.s32.totalorder %s120, %s121
      %p133 = scmp.eq.s32.totalorder %s34, 1
      %p134 = por %p132, %p133
      %p136 = scmp.ne.s32.totalorder %s121, %s135
      %p137 = scmp.eq.s32.totalorder %s34, 0
      %p138 = por %p136, %p137
      %s139 = sadd.s32 %s35, %s36
      %s140 = sadd.s32 %s47, %s43
      %s141 = ssub.s32 %s139, %s140
      %p142 = scmp.eq.s32.totalorder %s141, 0
      %s144 = sadd.s32 %s143, 1
      %s145 = scalar_select %p142, %s143, %s144
      %p148 = pneg %p142
      %p149 = scmp.eq.s32.totalorder %s28, 1
      %p150 = por %p148, %p149
      %p151 = scmp.ne.s32.totalorder %s143, %s146
      %p152 = scmp.eq.s32.totalorder %s28, 0
      %p153 = por %p151, %p152
      %p154 = scmp.ne.s32.totalorder %s143, %s146
      %p155 = scmp.eq.s32.totalorder %s33, 1
      %p156 = por %p154, %p155
      %p157 = scmp.ne.s32.totalorder %s146, %s147
      %p158 = scmp.eq.s32.totalorder %s33, 0
      %p159 = por %p157, %p158
      %p160 = scmp.ne.s32.totalorder %s146, %s147
      %p161 = scmp.eq.s32.totalorder %s34, 1
      %p162 = por %p160, %p161
      %p164 = scmp.ne.s32.totalorder %s147, %s163
      %p165 = scmp.eq.s32.totalorder %s34, 0
      %p166 = por %p164, %p165
      %s167 = ssub.s32 %s35, %s47
      %p168 = scmp.eq.s32.totalorder %s167, 0
      %s170 = sadd.s32 %s169, 1
      %s171 = scalar_select %p168, %s169, %s170
      %p174 = pneg %p168
      %p175 = scmp.eq.s32.totalorder %s28, 1
      %p176 = por %p174, %p175
      %p177 = scmp.ne.s32.totalorder %s169, %s172
      %p178 = scmp.eq.s32.totalorder %s28, 0
      %p179 = por %p177, %p178
      %p180 = scmp.ne.s32.totalorder %s169, %s172
      %p181 = scmp.eq.s32.totalorder %s33, 1
      %p182 = por %p180, %p181
      %p183 = scmp.ne.s32.totalorder %s172, %s173
      %p184 = scmp.eq.s32.totalorder %s33, 0
      %p185 = por %p183, %p184
      %p186 = scmp.ne.s32.totalorder %s172, %s173
      %p187 = scmp.eq.s32.totalorder %s34, 1
      %p188 = por %p186, %p187
      %p190 = scmp.ne.s32.totalorder %s173, %s189
      %p191 = scmp.eq.s32.totalorder %s34, 0
      %p192 = por %p190, %p191
      %s193 = ssub.s32 %s35, %s47
      %p194 = scmp.eq.s32.totalorder %s193, 0
      %s196 = sadd.s32 %s195, 1
      %s197 = scalar_select %p194, %s195, %s196
      %p200 = pneg %p194
      %p201 = scmp.eq.s32.totalorder %s28, 1
      %p202 = por %p200, %p201
      %p203 = scmp.ne.s32.totalorder %s195, %s198
      %p204 = scmp.eq.s32.totalorder %s28, 0
      %p205 = por %p203, %p204
      %p206 = scmp.ne.s32.totalorder %s195, %s198
      %p207 = scmp.eq.s32.totalorder %s33, 1
      %p208 = por %p206, %p207
      %p209 = scmp.ne.s32.totalorder %s198, %s199
      %p210 = scmp.eq.s32.totalorder %s33, 0
      %p211 = por %p209, %p210
      %p212 = scmp.ne.s32.totalorder %s198, %s199
      %p213 = scmp.eq.s32.totalorder %s34, 1
      %p214 = por %p212, %p213
      %p216 = scmp.ne.s32.totalorder %s199, %s215
      %p217 = scmp.eq.s32.totalorder %s34, 0
      %p218 = por %p216, %p217
      %s219 = ssub.s32 %s35, %s47
      %p220 = scmp.eq.s32.totalorder %s219, 0
      %s222 = sadd.s32 %s221, 1
      %s223 = scalar_select %p220, %s221, %s222
      %p226 = pneg %p220
      %p227 = scmp.eq.s32.totalorder %s28, 1
      %p228 = por %p226, %p227
      %p229 = scmp.ne.s32.totalorder %s221, %s224
      %p230 = scmp.eq.s32.totalorder %s28, 0
      %p231 = por %p229, %p230
      %p232 = scmp.ne.s32.totalorder %s221, %s224
      %p233 = scmp.eq.s32.totalorder %s33, 1
      %p234 = por %p232, %p233
      %p235 = scmp.ne.s32.totalorder %s224, %s225
      %p236 = scmp.eq.s32.totalorder %s33, 0
      %p237 = por %p235, %p236
      %p238 = scmp.ne.s32.totalorder %s224, %s225
      %p239 = scmp.eq.s32.totalorder %s34, 1
      %p240 = por %p238, %p239
      %p242 = scmp.ne.s32.totalorder %s225, %s241
      %p243 = scmp.eq.s32.totalorder %s34, 0
      %p244 = por %p242, %p243
      %p245 = scmp.le.s32.totalorder 1, %s28
      %p246 = scmp.lt.s32.totalorder %s28, 3
      %p247 = pnand %p245, %p246
      %p248 = pneg %p247
      // Predicated region
      $region9: #{tpu_custom_call.1} parent=5 // pred_check
        _
      $region10: #{tpu_custom_call.1} parent=5 // pred_check_branch
        %250 = sbr.rel (%p247) target = $region12
      $region11: #{tpu_custom_call.1} parent=5 // pred_region
        %s251 = ssub.s32 %s28, 1
        // Predicated region
        $region13: #{tpu_custom_call.1} parent=11 // pred_check
          %p252 = pneg %p89
        $region14: #{tpu_custom_call.1} parent=11 // pred_check_branch
          %254 = sbr.rel (%p252) target = $region16
        $region15: #{tpu_custom_call.1} parent=11 // pred_region
          %s256 = ssub.s32 2048, 2048
          %257 = vsyncadd [#allocation6], %s256
          %s258 = sshll.u32 [#allocation5], 4
          %s259 = int_to_ptr.vmem [resolvable:$true] %s258
          %264 = dma.hbm_to_vmem [thread:$0]  %s1, 2048, %s259, [#allocation6], 128, 128, 8
        $region16: #{tpu_custom_call.1} parent=11 // pred_fallthru
          _
        // Predicated region
        $region17: #{tpu_custom_call.1} parent=11 // pred_check
          %p265 = pneg %p110
        $region18: #{tpu_custom_call.1} parent=11 // pred_check_branch
          %267 = sbr.rel (%p265) target = $region20
        $region19: #{tpu_custom_call.1} parent=11 // pred_region
          %s269 = ssub.s32 2048, 2048
          %270 = vsyncadd [#allocation6], %s269
          %s271 = sshll.u32 [#allocation7], 4
          %s272 = int_to_ptr.vmem [resolvable:$true] %s271
          %277 = dma.hbm_to_vmem [thread:$0]  %s2, 2048, %s272, [#allocation6], 128, 128, 8
        $region20: #{tpu_custom_call.1} parent=11 // pred_fallthru
          _
        // Predicated region
        $region21: #{tpu_custom_call.1} parent=11 // pred_check
          %p278 = pneg %p131
        $region22: #{tpu_custom_call.1} parent=11 // pred_check_branch
          %280 = sbr.rel (%p278) target = $region24
        $region23: #{tpu_custom_call.1} parent=11 // pred_region
          %s282 = ssub.s32 2048, 2048
          %283 = vsyncadd [#allocation9], %s282
          %s284 = sshll.u32 [#allocation8], 4
          %s285 = int_to_ptr.vmem [resolvable:$true] %s284
          %290 = dma.hbm_to_vmem [thread:$0]  %s3, 2048, %s285, [#allocation9], 128, 128, 8
        $region24: #{tpu_custom_call.1} parent=11 // pred_fallthru
          _
      $region12: #{tpu_custom_call.1} parent=5 // pred_fallthru
        _
      %p291 = scmp.lt.s32.totalorder %s28, 2
      // Predicated region
      $region25: #{tpu_custom_call.1} parent=5 // pred_check
        %p292 = pneg %p291
      $region26: #{tpu_custom_call.1} parent=5 // pred_check_branch
        %294 = sbr.rel (%p292) target = $region28
      $region27: #{tpu_custom_call.1} parent=5 // pred_region
        // Predicated region
        $region29: #{tpu_custom_call.1} parent=27 // pred_check
          %p295 = pneg %p62
        $region30: #{tpu_custom_call.1} parent=27 // pred_check_branch
          %297 = sbr.rel (%p295) target = $region32
        $region31: #{tpu_custom_call.1} parent=27 // pred_region
          %s298 = sand.u32 %s52, 1
          %s299 = scalar_lea.sflag [#allocation3], %s298
          %s300 = sand.u32 %s52, 1
          %s301 = smul.addr %s300, 128
          %s302 = scalar_lea.vmem [#allocation2], %s301
          %s303 = sadd.s32 %s35, %s36
          %s304 = smul.u32 16, %s303
          %s306 = ssub.s32 2048, 2048
          %307 = vsyncadd %s299, %s306
          %s308 = smul.addr %s304, 128
          %s309 = scalar_lea.hbm %s0, %s308
          %s310 = sshll.u32 %s302, 4
          %s311 = int_to_ptr.vmem [resolvable:$true] %s310
          %316 = dma.hbm_to_vmem [thread:$0]  %s309, 2048, %s311, %s299, 128, 128, 8
        $region32: #{tpu_custom_call.1} parent=27 // pred_fallthru
          _
      $region28: #{tpu_custom_call.1} parent=5 // pred_fallthru
        _
      %p317 = scmp.le.s32.totalorder 1, %s28
      %p318 = scmp.lt.s32.totalorder %s28, 3
      %p319 = pnand %p317, %p318
      %p320 = pneg %p319
      // Predicated region
      $region33: #{tpu_custom_call.1} parent=5 // pred_check
        _
      $region34: #{tpu_custom_call.1} parent=5 // pred_check_branch
        %322 = sbr.rel (%p319) target = $region36
      $region35: #{tpu_custom_call.1} parent=5 // pred_region
        %s323 = ssub.s32 %s28, 1
        %s324 = sand.u32 %s55, 1
        %s325 = scalar_lea.sflag [#allocation3], %s324
        %s326 = sand.u32 %s55, 1
        %s327 = smul.addr %s326, 128
        %s328 = scalar_lea.vmem [#allocation2], %s327
        // Predicated region
        $region37: #{tpu_custom_call.1} parent=35 // pred_check
          %p329 = pneg %p68
        $region38: #{tpu_custom_call.1} parent=35 // pred_check_branch
          %331 = sbr.rel (%p329) target = $region40
        $region39: #{tpu_custom_call.1} parent=35 // pred_region
          %332 = dma.done %s325, 2048
        $region40: #{tpu_custom_call.1} parent=35 // pred_fallthru
          _
        // Predicated region
        $region41: #{tpu_custom_call.1} parent=35 // pred_check
          %p333 = pneg %p89
        $region42: #{tpu_custom_call.1} parent=35 // pred_check_branch
          %335 = sbr.rel (%p333) target = $region44
        $region43: #{tpu_custom_call.1} parent=35 // pred_region
          %336 = dma.done [#allocation6], 2048
        $region44: #{tpu_custom_call.1} parent=35 // pred_fallthru
          _
        // Predicated region
        $region45: #{tpu_custom_call.1} parent=35 // pred_check
          %p337 = pneg %p110
        $region46: #{tpu_custom_call.1} parent=35 // pred_check_branch
          %339 = sbr.rel (%p337) target = $region48
        $region47: #{tpu_custom_call.1} parent=35 // pred_region
          %340 = dma.done [#allocation6], 2048
        $region48: #{tpu_custom_call.1} parent=35 // pred_fallthru
          _
        // Predicated region
        $region49: #{tpu_custom_call.1} parent=35 // pred_check
          %p341 = pneg %p131
        $region50: #{tpu_custom_call.1} parent=35 // pred_check_branch
          %343 = sbr.rel (%p341) target = $region52
        $region51: #{tpu_custom_call.1} parent=35 // pred_region
          %344 = dma.done [#allocation9], 2048
        $region52: #{tpu_custom_call.1} parent=35 // pred_fallthru
          _
        %s345 = sand.u32 %s55, 1
        %s346 = scalar_lea.sflag [#allocation3], %s345
        %s347 = sand.u32 %s55, 1
        %s348 = smul.addr %s347, 128
        %s349 = scalar_lea.vmem [#allocation2], %s348
        %p350 = pneg %p68
        %p351 = pneg %p65
        %p352 = pneg %p89
        %p353 = pneg %p86
        %p354 = pneg %p110
        %p355 = pneg %p107
        %p356 = pneg %p131
        %p357 = pneg %p128
        %p358 = pneg %p159
        %p359 = pneg %p156
        %s360 = sand.u32 %s146, 1
        %s361 = scalar_lea.sflag [#allocation4], %s360
        %s362 = sand.u32 %s146, 1
        %s363 = smul.addr %s362, 128
        %s364 = scalar_lea.vmem [#allocation10], %s363
        %p365 = pneg %p185
        %p366 = pneg %p182
        %s367 = sand.u32 %s33, 1
        %s368 = scalar_lea.sflag [#allocation12], %s367
        %s369 = sand.u32 %s172, 1
        %s370 = smul.addr %s369, 128
        %s371 = scalar_lea.vmem [#allocation11], %s370
        %p372 = pneg %p211
        %p373 = pneg %p208
        %s374 = sand.u32 %s33, 1
        %s375 = scalar_lea.sflag [#allocation12], %s374
        %s376 = sand.u32 %s198, 1
        %s377 = smul.addr %s376, 128
        %s378 = scalar_lea.vmem [#allocation13], %s377
        %p379 = pneg %p237
        %p380 = pneg %p234
        %s381 = sand.u32 %s224, 1
        %s382 = scalar_lea.sflag [#allocation15], %s381
        %s383 = sand.u32 %s224, 1
        %s384 = smul.addr %s383, 128
        %s385 = scalar_lea.vmem [#allocation14], %s384
        %s386 = sadd.s32 %s37, %s38
        %s387 = smul.u32 16, %s386
        %s388 = sadd.s32 %s37, %s38
        %s389 = smul.u32 16, %s388
        %p391 = scmp.eq.s32.totalorder %s38, 0
        // Predicated region
        $region53: #{tpu_custom_call.1} parent=35 // pred_check
          %p392 = pneg %p391
        $region54: #{tpu_custom_call.1} parent=35 // pred_check_branch
          %394 = sbr.rel (%p392) target = $region56
        $region55: #{tpu_custom_call.1} parent=35 // pred_region
          %395 = vst [vmem:[%s371] sm:$0xff] 0.0
          %396 = vst [vmem:[%s371 + $0x8] sm:$0xff] 0.0
          %397 = vst [vmem:[%s371 + $0x10] sm:$0xff] 0.0
          %398 = vst [vmem:[%s371 + $0x18] sm:$0xff] 0.0
          %399 = vst [vmem:[%s371 + $0x20] sm:$0xff] 0.0
          %400 = vst [vmem:[%s371 + $0x28] sm:$0xff] 0.0
          %401 = vst [vmem:[%s371 + $0x30] sm:$0xff] 0.0
          %402 = vst [vmem:[%s371 + $0x38] sm:$0xff] 0.0
          %403 = vst [vmem:[%s371 + $0x40] sm:$0xff] 0.0
          %404 = vst [vmem:[%s371 + $0x48] sm:$0xff] 0.0
          %405 = vst [vmem:[%s371 + $0x50] sm:$0xff] 0.0
          %406 = vst [vmem:[%s371 + $0x58] sm:$0xff] 0.0
          %407 = vst [vmem:[%s371 + $0x60] sm:$0xff] 0.0
          %408 = vst [vmem:[%s371 + $0x68] sm:$0xff] 0.0
          %409 = vst [vmem:[%s371 + $0x70] sm:$0xff] 0.0
          %410 = vst [vmem:[%s371 + $0x78] sm:$0xff] 0.0
          %411 = vst [vmem:[%s378] sm:$0xff] 0.0
          %412 = vst [vmem:[%s378 + $0x8] sm:$0xff] 0.0
          %413 = vst [vmem:[%s378 + $0x10] sm:$0xff] 0.0
          %414 = vst [vmem:[%s378 + $0x18] sm:$0xff] 0.0
          %415 = vst [vmem:[%s378 + $0x20] sm:$0xff] 0.0
          %416 = vst [vmem:[%s378 + $0x28] sm:$0xff] 0.0
          %417 = vst [vmem:[%s378 + $0x30] sm:$0xff] 0.0
          %418 = vst [vmem:[%s378 + $0x38] sm:$0xff] 0.0
          %419 = vst [vmem:[%s378 + $0x40] sm:$0xff] 0.0
          %420 = vst [vmem:[%s378 + $0x48] sm:$0xff] 0.0
          %421 = vst [vmem:[%s378 + $0x50] sm:$0xff] 0.0
          %422 = vst [vmem:[%s378 + $0x58] sm:$0xff] 0.0
          %423 = vst [vmem:[%s378 + $0x60] sm:$0xff] 0.0
          %424 = vst [vmem:[%s378 + $0x68] sm:$0xff] 0.0
          %425 = vst [vmem:[%s378 + $0x70] sm:$0xff] 0.0
          %426 = vst [vmem:[%s378 + $0x78] sm:$0xff] 0.0
          %427 = vst [vmem:[%s385] sm:$0xff] 0.0
          %428 = vst [vmem:[%s385 + $0x8] sm:$0xff] 0.0
          %429 = vst [vmem:[%s385 + $0x10] sm:$0xff] 0.0
          %430 = vst [vmem:[%s385 + $0x18] sm:$0xff] 0.0
          %431 = vst [vmem:[%s385 + $0x20] sm:$0xff] 0.0
          %432 = vst [vmem:[%s385 + $0x28] sm:$0xff] 0.0
          %433 = vst [vmem:[%s385 + $0x30] sm:$0xff] 0.0
          %434 = vst [vmem:[%s385 + $0x38] sm:$0xff] 0.0
          %435 = vst [vmem:[%s385 + $0x40] sm:$0xff] 0.0
          %436 = vst [vmem:[%s385 + $0x48] sm:$0xff] 0.0
          %437 = vst [vmem:[%s385 + $0x50] sm:$0xff] 0.0
          %438 = vst [vmem:[%s385 + $0x58] sm:$0xff] 0.0
          %439 = vst [vmem:[%s385 + $0x60] sm:$0xff] 0.0
          %440 = vst [vmem:[%s385 + $0x68] sm:$0xff] 0.0
          %441 = vst [vmem:[%s385 + $0x70] sm:$0xff] 0.0
          %442 = vst [vmem:[%s385 + $0x78] sm:$0xff] 0.0
        $region56: #{tpu_custom_call.1} parent=35 // pred_fallthru
          _
        %v443 = vld [vmem:[%s328] sm:$0xff]
        %v444 = vld [vmem:[%s328 + $0x8] sm:$0xff]
        %v445 = vld [vmem:[%s328 + $0x10] sm:$0xff]
        %v446 = vld [vmem:[%s328 + $0x18] sm:$0xff]
        %v447 = vld [vmem:[%s328 + $0x20] sm:$0xff]
        %v448 = vld [vmem:[%s328 + $0x28] sm:$0xff]
        %v449 = vld [vmem:[%s328 + $0x30] sm:$0xff]
        %v450 = vld [vmem:[%s328 + $0x38] sm:$0xff]
        %v451 = vld [vmem:[%s328 + $0x40] sm:$0xff]
        %v452 = vld [vmem:[%s328 + $0x48] sm:$0xff]
        %v453 = vld [vmem:[%s328 + $0x50] sm:$0xff]
        %v454 = vld [vmem:[%s328 + $0x58] sm:$0xff]
        %v455 = vld [vmem:[%s328 + $0x60] sm:$0xff]
        %v456 = vld [vmem:[%s328 + $0x68] sm:$0xff]
        %v457 = vld [vmem:[%s328 + $0x70] sm:$0xff]
        %v458 = vld [vmem:[%s328 + $0x78] sm:$0xff]
        %v459 = vpack.c.bf16 %v444, %v443
        %v460 = vpack.c.bf16 %v446, %v445
        %v461 = vpack.c.bf16 %v448, %v447
        %v462 = vpack.c.bf16 %v450, %v449
        %v463 = vpack.c.bf16 %v452, %v451
        %v464 = vpack.c.bf16 %v454, %v453
        %v465 = vpack.c.bf16 %v456, %v455
        %v466 = vpack.c.bf16 %v458, %v457
        %v467 = vld [vmem:[#allocation5] sm:$0xff]
        %v468 = vld [vmem:[#allocation5 + $0x8] sm:$0xff]
        %v469 = vld [vmem:[#allocation5 + $0x10] sm:$0xff]
        %v470 = vld [vmem:[#allocation5 + $0x18] sm:$0xff]
        %v471 = vld [vmem:[#allocation5 + $0x20] sm:$0xff]
        %v472 = vld [vmem:[#allocation5 + $0x28] sm:$0xff]
        %v473 = vld [vmem:[#allocation5 + $0x30] sm:$0xff]
        %v474 = vld [vmem:[#allocation5 + $0x38] sm:$0xff]
        %v475 = vld [vmem:[#allocation5 + $0x40] sm:$0xff]
        %v476 = vld [vmem:[#allocation5 + $0x48] sm:$0xff]
        %v477 = vld [vmem:[#allocation5 + $0x50] sm:$0xff]
        %v478 = vld [vmem:[#allocation5 + $0x58] sm:$0xff]
        %v479 = vld [vmem:[#allocation5 + $0x60] sm:$0xff]
        %v480 = vld [vmem:[#allocation5 + $0x68] sm:$0xff]
        %v481 = vld [vmem:[#allocation5 + $0x70] sm:$0xff]
        %v482 = vld [vmem:[#allocation5 + $0x78] sm:$0xff]
        %483 = vmatprep.subr.mxu0 0.0
        %484 = vmatpush1.msra.mxu0 %v467
        %485 = vmatprep.subr.mxu0 0.0
        %486 = vmatpush1.msra.mxu0 %v468
        %487 = vmatprep.subr.mxu0 0.0
        %488 = vmatpush1.msra.mxu0 %v469
        %489 = vmatprep.subr.mxu0 0.0
        %490 = vmatpush1.msra.mxu0 %v470
        %491 = vmatprep.subr.mxu0 0.0
        %492 = vmatpush1.msra.mxu0 %v471
        %493 = vmatprep.subr.mxu0 0.0
        %494 = vmatpush1.msra.mxu0 %v472
        %495 = vmatprep.subr.mxu0 0.0
        %496 = vmatpush1.msra.mxu0 %v473
        %497 = vmatprep.subr.mxu0 0.0
        %498 = vmatpush1.msra.mxu0 %v474
        %499 = vmatprep.subr.mxu0 0.0
        %500 = vmatpush1.msra.mxu0 %v475
        %501 = vmatprep.subr.mxu0 0.0
        %502 = vmatpush1.msra.mxu0 %v476
        %503 = vmatprep.subr.mxu0 0.0
        %504 = vmatpush1.msra.mxu0 %v477
        %505 = vmatprep.subr.mxu0 0.0
        %506 = vmatpush1.msra.mxu0 %v478
        %507 = vmatprep.subr.mxu0 0.0
        %508 = vmatpush1.msra.mxu0 %v479
        %509 = vmatprep.subr.mxu0 0.0
        %510 = vmatpush1.msra.mxu0 %v480
        %511 = vmatprep.subr.mxu0 0.0
        %512 = vmatpush1.msra.mxu0 %v481
        %513 = vmatprep.subr.mxu0 0.0
        %514 = vmatpush1.msra.mxu0 %v482
        %515 = vmatprep.subr.mxu0 0.0
        %516 = vmatpush1.msra.mxu0 0.0
        %517 = vmatprep.subr.mxu0 0.0
        %518 = vmatpush1.msra.mxu0 0.0
        %519 = vmatprep.subr.mxu0 0.0
        %520 = vmatpush1.msra.mxu0 0.0
        %521 = vmatprep.subr.mxu0 0.0
        %522 = vmatpush1.msra.mxu0 0.0
        %523 = vmatprep.subr.mxu0 0.0
        %524 = vmatpush1.msra.mxu0 0.0
        %525 = vmatprep.subr.mxu0 0.0
        %526 = vmatpush1.msra.mxu0 0.0
        %527 = vmatprep.subr.mxu0 0.0
        %528 = vmatpush1.msra.mxu0 0.0
        %529 = vmatprep.subr.mxu0 0.0
        %530 = vmatpush1.msra.mxu0 0.0
        %531 = vmatprep.subr.mxu0 0.0
        %532 = vmatpush1.msra.mxu0 0.0
        %533 = vmatprep.subr.mxu0 0.0
        %534 = vmatpush1.msra.mxu0 0.0
        %535 = vmatprep.subr.mxu0 0.0
        %536 = vmatpush1.msra.mxu0 0.0
        %537 = vmatprep.subr.mxu0 0.0
        %538 = vmatpush1.msra.mxu0 0.0
        %539 = vmatprep.subr.mxu0 0.0
        %540 = vmatpush1.msra.mxu0 0.0
        %541 = vmatprep.subr.mxu0 0.0
        %542 = vmatpush1.msra.mxu0 0.0
        %543 = vmatprep.subr.mxu0 0.0
        %544 = vmatpush1.msra.mxu0 0.0
        %545 = vmatprep.subr.mxu0 0.0
        %546 = vmatpush1.msra.mxu0 0.0
        %547 = vmatprep.mubr.f32.mxu0 0.0
        %548 = vmatmul.mubr.f32.gmra.mrb[0].mxu0 %v443
        %v549 = vpop.f32.mrb[0].mxu0
        %v550 = vadd.f32 0.0, %v549
        %v551 = vpop.f32.mrb[0].mxu0
        %552 = vmatprep.mubr.f32.mxu0 0.0
        %553 = vmatmul.mubr.f32.gmra.mrb[0].mxu0 %v444
        %v554 = vpop.f32.mrb[0].mxu0
        %v555 = vadd.f32 0.0, %v554
        %v556 = vpop.f32.mrb[0].mxu0
        %557 = vmatprep.mubr.f32.mxu0 0.0
        %558 = vmatmul.mubr.f32.gmra.mrb[0].mxu0 %v445
        %v559 = vpop.f32.mrb[0].mxu0
        %v560 = vadd.f32 0.0, %v559
        %v561 = vpop.f32.mrb[0].mxu0
        %562 = vmatprep.mubr.f32.mxu0 0.0
        %563 = vmatmul.mubr.f32.gmra.mrb[0].mxu0 %v446
        %v564 = vpop.f32.mrb[0].mxu0
        %v565 = vadd.f32 0.0, %v564
        %v566 = vpop.f32.mrb[0].mxu0
        %567 = vmatprep.mubr.f32.mxu0 0.0
        %568 = vmatmul.mubr.f32.gmra.mrb[0].mxu0 %v447
        %v569 = vpop.f32.mrb[0].mxu0
        %v570 = vadd.f32 0.0, %v569
        %v571 = vpop.f32.mrb[0].mxu0
        %572 = vmatprep.mubr.f32.mxu0 0.0
        %573 = vmatmul.mubr.f32.gmra.mrb[0].mxu0 %v448
        %v574 = vpop.f32.mrb[0].mxu0
        %v575 = vadd.f32 0.0, %v574
        %v576 = vpop.f32.mrb[0].mxu0
        %577 = vmatprep.mubr.f32.mxu0 0.0
        %578 = vmatmul.mubr.f32.gmra.mrb[0].mxu0 %v449
        %v579 = vpop.f32.mrb[0].mxu0
        %v580 = vadd.f32 0.0, %v579
        %v581 = vpop.f32.mrb[0].mxu0
        %582 = vmatprep.mubr.f32.mxu0 0.0
        %583 = vmatmul.mubr.f32.gmra.mrb[0].mxu0 %v450
        %v584 = vpop.f32.mrb[0].mxu0
        %v585 = vadd.f32 0.0, %v584
        %v586 = vpop.f32.mrb[0].mxu0
        %587 = vmatprep.mubr.f32.mxu0 0.0
        %588 = vmatmul.mubr.f32.gmra.mrb[0].mxu0 %v451
        %v589 = vpop.f32.mrb[0].mxu0
        %v590 = vadd.f32 0.0, %v589
        %v591 = vpop.f32.mrb[0].mxu0
        %592 = vmatprep.mubr.f32.mxu0 0.0
        %593 = vmatmul.mubr.f32.gmra.mrb[0].mxu0 %v452
        %v594 = vpop.f32.mrb[0].mxu0
        %v595 = vadd.f32 0.0, %v594
        %v596 = vpop.f32.mrb[0].mxu0
        %597 = vmatprep.mubr.f32.mxu0 0.0
        %598 = vmatmul.mubr.f32.gmra.mrb[0].mxu0 %v453
        %v599 = vpop.f32.mrb[0].mxu0
        %v600 = vadd.f32 0.0, %v599
        %v601 = vpop.f32.mrb[0].mxu0
        %602 = vmatprep.mubr.f32.mxu0 0.0
        %603 = vmatmul.mubr.f32.gmra.mrb[0].mxu0 %v454
        %v604 = vpop.f32.mrb[0].mxu0
        %v605 = vadd.f32 0.0, %v604
        %v606 = vpop.f32.mrb[0].mxu0
        %607 = vmatprep.mubr.f32.mxu0 0.0
        %608 = vmatmul.mubr.f32.gmra.mrb[0].mxu0 %v455
        %v609 = vpop.f32.mrb[0].mxu0
        %v610 = vadd.f32 0.0, %v609
        %v611 = vpop.f32.mrb[0].mxu0
        %612 = vmatprep.mubr.f32.mxu0 0.0
        %613 = vmatmul.mubr.f32.gmra.mrb[0].mxu0 %v456
        %v614 = vpop.f32.mrb[0].mxu0
        %v615 = vadd.f32 0.0, %v614
        %v616 = vpop.f32.mrb[0].mxu0
        %617 = vmatprep.mubr.f32.mxu0 0.0
        %618 = vmatmul.mubr.f32.gmra.mrb[0].mxu0 %v457
        %v619 = vpop.f32.mrb[0].mxu0
        %v620 = vadd.f32 0.0, %v619
        %v621 = vpop.f32.mrb[0].mxu0
        %622 = vmatprep.mubr.f32.mxu0 0.0
        %623 = vmatmul.mubr.f32.gmra.mrb[0].mxu0 %v458
        %v624 = vpop.f32.mrb[0].mxu0
        %v625 = vadd.f32 0.0, %v624
        %v626 = vpop.f32.mrb[0].mxu0
        %627 = vdwg.mxu0
        %vm628 = vcmp.ge.f32.partialorder %v550, 0.5
        %vm629 = vcmp.ge.f32.partialorder %v555, 0.5
        %vm630 = vcmp.ge.f32.partialorder %v560, 0.5
        %vm631 = vcmp.ge.f32.partialorder %v565, 0.5
        %vm632 = vcmp.ge.f32.partialorder %v570, 0.5
        %vm633 = vcmp.ge.f32.partialorder %v575, 0.5
        %vm634 = vcmp.ge.f32.partialorder %v580, 0.5
        %vm635 = vcmp.ge.f32.partialorder %v585, 0.5
        %vm636 = vcmp.ge.f32.partialorder %v590, 0.5
        %vm637 = vcmp.ge.f32.partialorder %v595, 0.5
        %vm638 = vcmp.ge.f32.partialorder %v600, 0.5
        %vm639 = vcmp.ge.f32.partialorder %v605, 0.5
        %vm640 = vcmp.ge.f32.partialorder %v610, 0.5
        %vm641 = vcmp.ge.f32.partialorder %v615, 0.5
        %vm642 = vcmp.ge.f32.partialorder %v620, 0.5
        %vm643 = vcmp.ge.f32.partialorder %v625, 0.5
        %v644 = vsel %vm628, 1, 0
        %v645 = vsel %vm629, 1, 0
        %v646 = vsel %vm630, 1, 0
        %v647 = vsel %vm631, 1, 0
        %v648 = vsel %vm632, 1, 0
        %v649 = vsel %vm633, 1, 0
        %v650 = vsel %vm634, 1, 0
        %v651 = vsel %vm635, 1, 0
        %v652 = vsel %vm636, 1, 0
        %v653 = vsel %vm637, 1, 0
        %v654 = vsel %vm638, 1, 0
        %v655 = vsel %vm639, 1, 0
        %v656 = vsel %vm640, 1, 0
        %v657 = vsel %vm641, 1, 0
        %v658 = vsel %vm642, 1, 0
        %v659 = vsel %vm643, 1, 0
        %v660 = vcvt.s32.f32 %v644
        %v661 = vcvt.s32.f32 %v645
        %v662 = vcvt.s32.f32 %v646
        %v663 = vcvt.s32.f32 %v647
        %v664 = vcvt.s32.f32 %v648
        %v665 = vcvt.s32.f32 %v649
        %v666 = vcvt.s32.f32 %v650
        %v667 = vcvt.s32.f32 %v651
        %v668 = vcvt.s32.f32 %v652
        %v669 = vcvt.s32.f32 %v653
        %v670 = vcvt.s32.f32 %v654
        %v671 = vcvt.s32.f32 %v655
        %v672 = vcvt.s32.f32 %v656
        %v673 = vcvt.s32.f32 %v657
        %v674 = vcvt.s32.f32 %v658
        %v675 = vcvt.s32.f32 %v659
        %v676 = vpack.c.bf16 %v661, %v660
        %v677 = vpack.c.bf16 %v663, %v662
        %v678 = vpack.c.bf16 %v665, %v664
        %v679 = vpack.c.bf16 %v667, %v666
        %v680 = vpack.c.bf16 %v669, %v668
        %v681 = vpack.c.bf16 %v671, %v670
        %v682 = vpack.c.bf16 %v673, %v672
        %v683 = vpack.c.bf16 %v675, %v674
        %v684 = vld [vmem:[%s371] sm:$0xff]
        %v685 = vld [vmem:[%s371 + $0x8] sm:$0xff]
        %v686 = vld [vmem:[%s371 + $0x10] sm:$0xff]
        %v687 = vld [vmem:[%s371 + $0x18] sm:$0xff]
        %v688 = vld [vmem:[%s371 + $0x20] sm:$0xff]
        %v689 = vld [vmem:[%s371 + $0x28] sm:$0xff]
        %v690 = vld [vmem:[%s371 + $0x30] sm:$0xff]
        %v691 = vld [vmem:[%s371 + $0x38] sm:$0xff]
        %v692 = vld [vmem:[%s371 + $0x40] sm:$0xff]
        %v693 = vld [vmem:[%s371 + $0x48] sm:$0xff]
        %v694 = vld [vmem:[%s371 + $0x50] sm:$0xff]
        %v695 = vld [vmem:[%s371 + $0x58] sm:$0xff]
        %v696 = vld [vmem:[%s371 + $0x60] sm:$0xff]
        %v697 = vld [vmem:[%s371 + $0x68] sm:$0xff]
        %v698 = vld [vmem:[%s371 + $0x70] sm:$0xff]
        %v699 = vld [vmem:[%s371 + $0x78] sm:$0xff]
        %700 = vxpose.xlu0.c.b16.start [1/8] %v459, 128
        %701 = vxpose.xlu0.c.b16.cont [2/8] %v460, 128
        %702 = vxpose.xlu0.c.b16.cont [3/8] %v461, 128
        %703 = vxpose.xlu0.c.b16.cont [4/8] %v462, 128
        %704 = vxpose.xlu0.c.b16.cont [5/8] %v463, 128
        %705 = vxpose.xlu0.c.b16.cont [6/8] %v464, 128
        %706 = vxpose.xlu0.c.b16.cont [7/8] %v465, 128
        %707 = vxpose.xlu0.c.b16.end [8/8] %v466, 128
        %v708 = vpop.trf.xlu0
        %v709 = vpop.trf.xlu0
        %v710 = vpop.trf.xlu0
        %v711 = vpop.trf.xlu0
        %v712 = vpop.trf.xlu0
        %v713 = vpop.trf.xlu0
        %v714 = vpop.trf.xlu0
        %v715 = vpop.trf.xlu0
        %716 = vmatprep.subr.bf16.mxu0 0
        %717 = vmatpush1.bf16.msra.mxu0 %v676
        %718 = vmatprep.subr.bf16.mxu0 0
        %719 = vmatpush1.bf16.msra.mxu0 %v677
        %720 = vmatprep.subr.bf16.mxu0 0
        %721 = vmatpush1.bf16.msra.mxu0 %v678
        %722 = vmatprep.subr.bf16.mxu0 0
        %723 = vmatpush1.bf16.msra.mxu0 %v679
        %724 = vmatprep.subr.bf16.mxu0 0
        %725 = vmatpush1.bf16.msra.mxu0 %v680
        %726 = vmatprep.subr.bf16.mxu0 0
        %727 = vmatpush1.bf16.msra.mxu0 %v681
        %728 = vmatprep.subr.bf16.mxu0 0
        %729 = vmatpush1.bf16.msra.mxu0 %v682
        %730 = vmatprep.subr.bf16.mxu0 0
        %731 = vmatpush1.bf16.msra.mxu0 %v683
        %732 = vmatprep.subr.bf16.mxu0 0
        %733 = vmatpush1.bf16.msra.mxu0 0
        %734 = vmatprep.subr.bf16.mxu0 0
        %735 = vmatpush1.bf16.msra.mxu0 0
        %736 = vmatprep.subr.bf16.mxu0 0
        %737 = vmatpush1.bf16.msra.mxu0 0
        %738 = vmatprep.subr.bf16.mxu0 0
        %739 = vmatpush1.bf16.msra.mxu0 0
        %740 = vmatprep.subr.bf16.mxu0 0
        %741 = vmatpush1.bf16.msra.mxu0 0
        %742 = vmatprep.subr.bf16.mxu0 0
        %743 = vmatpush1.bf16.msra.mxu0 0
        %744 = vmatprep.subr.bf16.mxu0 0
        %745 = vmatpush1.bf16.msra.mxu0 0
        %746 = vmatprep.subr.bf16.mxu0 0
        %747 = vmatpush1.bf16.msra.mxu0 0
        %748 = vmatprep.mubr.bf16.mxu0 0
        %749 = vmatmul.mubr.bf16.gmra.mrb[0].mxu0 %v708
        %v750 = vpop.f32.mrb[0].mxu0
        %v751 = vadd.f32 0.0, %v750
        %v752 = vpop.f32.mrb[0].mxu0
        %v753 = vpop.f32.mrb[0].mxu0
        %v754 = vadd.f32 0.0, %v753
        %v755 = vpop.f32.mrb[0].mxu0
        %756 = vmatprep.mubr.bf16.mxu0 0
        %757 = vmatmul.mubr.bf16.gmra.mrb[0].mxu0 %v709
        %v758 = vpop.f32.mrb[0].mxu0
        %v759 = vadd.f32 0.0, %v758
        %v760 = vpop.f32.mrb[0].mxu0
        %v761 = vpop.f32.mrb[0].mxu0
        %v762 = vadd.f32 0.0, %v761
        %v763 = vpop.f32.mrb[0].mxu0
        %764 = vmatprep.mubr.bf16.mxu0 0
        %765 = vmatmul.mubr.bf16.gmra.mrb[0].mxu0 %v710
        %v766 = vpop.f32.mrb[0].mxu0
        %v767 = vadd.f32 0.0, %v766
        %v768 = vpop.f32.mrb[0].mxu0
        %v769 = vpop.f32.mrb[0].mxu0
        %v770 = vadd.f32 0.0, %v769
        %v771 = vpop.f32.mrb[0].mxu0
        %772 = vmatprep.mubr.bf16.mxu0 0
        %773 = vmatmul.mubr.bf16.gmra.mrb[0].mxu0 %v711
        %v774 = vpop.f32.mrb[0].mxu0
        %v775 = vadd.f32 0.0, %v774
        %v776 = vpop.f32.mrb[0].mxu0
        %v777 = vpop.f32.mrb[0].mxu0
        %v778 = vadd.f32 0.0, %v777
        %v779 = vpop.f32.mrb[0].mxu0
        %780 = vmatprep.mubr.bf16.mxu0 0
        %781 = vmatmul.mubr.bf16.gmra.mrb[0].mxu0 %v712
        %v782 = vpop.f32.mrb[0].mxu0
        %v783 = vadd.f32 0.0, %v782
        %v784 = vpop.f32.mrb[0].mxu0
        %v785 = vpop.f32.mrb[0].mxu0
        %v786 = vadd.f32 0.0, %v785
        %v787 = vpop.f32.mrb[0].mxu0
        %788 = vmatprep.mubr.bf16.mxu0 0
        %789 = vmatmul.mubr.bf16.gmra.mrb[0].mxu0 %v713
        %v790 = vpop.f32.mrb[0].mxu0
        %v791 = vadd.f32 0.0, %v790
        %v792 = vpop.f32.mrb[0].mxu0
        %v793 = vpop.f32.mrb[0].mxu0
        %v794 = vadd.f32 0.0, %v793
        %v795 = vpop.f32.mrb[0].mxu0
        %796 = vmatprep.mubr.bf16.mxu0 0
        %797 = vmatmul.mubr.bf16.gmra.mrb[0].mxu0 %v714
        %v798 = vpop.f32.mrb[0].mxu0
        %v799 = vadd.f32 0.0, %v798
        %v800 = vpop.f32.mrb[0].mxu0
        %v801 = vpop.f32.mrb[0].mxu0
        %v802 = vadd.f32 0.0, %v801
        %v803 = vpop.f32.mrb[0].mxu0
        %804 = vmatprep.mubr.bf16.mxu0 0
        %805 = vmatmul.mubr.bf16.gmra.mrb[0].mxu0 %v715
        %v806 = vpop.f32.mrb[0].mxu0
        %v807 = vadd.f32 0.0, %v806
        %v808 = vpop.f32.mrb[0].mxu0
        %v809 = vpop.f32.mrb[0].mxu0
        %v810 = vadd.f32 0.0, %v809
        %v811 = vpop.f32.mrb[0].mxu0
        %812 = vdwg.mxu0
        %v813 = vadd.f32 %v684, %v751
        %v814 = vadd.f32 %v685, %v754
        %v815 = vadd.f32 %v686, %v759
        %v816 = vadd.f32 %v687, %v762
        %v817 = vadd.f32 %v688, %v767
        %v818 = vadd.f32 %v689, %v770
        %v819 = vadd.f32 %v690, %v775
        %v820 = vadd.f32 %v691, %v778
        %v821 = vadd.f32 %v692, %v783
        %v822 = vadd.f32 %v693, %v786
        %v823 = vadd.f32 %v694, %v791
        %v824 = vadd.f32 %v695, %v794
        %v825 = vadd.f32 %v696, %v799
        %v826 = vadd.f32 %v697, %v802
        %v827 = vadd.f32 %v698, %v807
        %v828 = vadd.f32 %v699, %v810
        %829 = vst [vmem:[%s371] sm:$0xff] %v813
        %830 = vst [vmem:[%s371 + $0x8] sm:$0xff] %v814
        %831 = vst [vmem:[%s371 + $0x10] sm:$0xff] %v815
        %832 = vst [vmem:[%s371 + $0x18] sm:$0xff] %v816
        %833 = vst [vmem:[%s371 + $0x20] sm:$0xff] %v817
        %834 = vst [vmem:[%s371 + $0x28] sm:$0xff] %v818
        %835 = vst [vmem:[%s371 + $0x30] sm:$0xff] %v819
        %836 = vst [vmem:[%s371 + $0x38] sm:$0xff] %v820
        %837 = vst [vmem:[%s371 + $0x40] sm:$0xff] %v821
        %838 = vst [vmem:[%s371 + $0x48] sm:$0xff] %v822
        %839 = vst [vmem:[%s371 + $0x50] sm:$0xff] %v823
        %840 = vst [vmem:[%s371 + $0x58] sm:$0xff] %v824
        %841 = vst [vmem:[%s371 + $0x60] sm:$0xff] %v825
        %842 = vst [vmem:[%s371 + $0x68] sm:$0xff] %v826
        %843 = vst [vmem:[%s371 + $0x70] sm:$0xff] %v827
        %844 = vst [vmem:[%s371 + $0x78] sm:$0xff] %v828
        %v845 = vld [vmem:[#allocation7] sm:$0xff]
        %v846 = vld [vmem:[#allocation7 + $0x8] sm:$0xff]
        %v847 = vld [vmem:[#allocation7 + $0x10] sm:$0xff]
        %v848 = vld [vmem:[#allocation7 + $0x18] sm:$0xff]
        %v849 = vld [vmem:[#allocation7 + $0x20] sm:$0xff]
        %v850 = vld [vmem:[#allocation7 + $0x28] sm:$0xff]
        %v851 = vld [vmem:[#allocation7 + $0x30] sm:$0xff]
        %v852 = vld [vmem:[#allocation7 + $0x38] sm:$0xff]
        %v853 = vld [vmem:[#allocation7 + $0x40] sm:$0xff]
        %v854 = vld [vmem:[#allocation7 + $0x48] sm:$0xff]
        %v855 = vld [vmem:[#allocation7 + $0x50] sm:$0xff]
        %v856 = vld [vmem:[#allocation7 + $0x58] sm:$0xff]
        %v857 = vld [vmem:[#allocation7 + $0x60] sm:$0xff]
        %v858 = vld [vmem:[#allocation7 + $0x68] sm:$0xff]
        %v859 = vld [vmem:[#allocation7 + $0x70] sm:$0xff]
        %v860 = vld [vmem:[#allocation7 + $0x78] sm:$0xff]
        %861 = vmatprep.subr.mxu0 0.0
        %862 = vmatpush1.msra.mxu0 %v845
        %863 = vmatprep.subr.mxu0 0.0
        %864 = vmatpush1.msra.mxu0 %v846
        %865 = vmatprep.subr.mxu0 0.0
        %866 = vmatpush1.msra.mxu0 %v847
        %867 = vmatprep.subr.mxu0 0.0
        %868 = vmatpush1.msra.mxu0 %v848
        %869 = vmatprep.subr.mxu0 0.0
        %870 = vmatpush1.msra.mxu0 %v849
        %871 = vmatprep.subr.mxu0 0.0
        %872 = vmatpush1.msra.mxu0 %v850
        %873 = vmatprep.subr.mxu0 0.0
        %874 = vmatpush1.msra.mxu0 %v851
        %875 = vmatprep.subr.mxu0 0.0
        %876 = vmatpush1.msra.mxu0 %v852
        %877 = vmatprep.subr.mxu0 0.0
        %878 = vmatpush1.msra.mxu0 %v853
        %879 = vmatprep.subr.mxu0 0.0
        %880 = vmatpush1.msra.mxu0 %v854
        %881 = vmatprep.subr.mxu0 0.0
        %882 = vmatpush1.msra.mxu0 %v855
        %883 = vmatprep.subr.mxu0 0.0
        %884 = vmatpush1.msra.mxu0 %v856
        %885 = vmatprep.subr.mxu0 0.0
        %886 = vmatpush1.msra.mxu0 %v857
        %887 = vmatprep.subr.mxu0 0.0
        %888 = vmatpush1.msra.mxu0 %v858
        %889 = vmatprep.subr.mxu0 0.0
        %890 = vmatpush1.msra.mxu0 %v859
        %891 = vmatprep.subr.mxu0 0.0
        %892 = vmatpush1.msra.mxu0 %v860
        %893 = vmatprep.subr.mxu0 0.0
        %894 = vmatpush1.msra.mxu0 0.0
        %895 = vmatprep.subr.mxu0 0.0
        %896 = vmatpush1.msra.mxu0 0.0
        %897 = vmatprep.subr.mxu0 0.0
        %898 = vmatpush1.msra.mxu0 0.0
        %899 = vmatprep.subr.mxu0 0.0
        %900 = vmatpush1.msra.mxu0 0.0
        %901 = vmatprep.subr.mxu0 0.0
        %902 = vmatpush1.msra.mxu0 0.0
        %903 = vmatprep.subr.mxu0 0.0
        %904 = vmatpush1.msra.mxu0 0.0
        %905 = vmatprep.subr.mxu0 0.0
        %906 = vmatpush1.msra.mxu0 0.0
        %907 = vmatprep.subr.mxu0 0.0
        %908 = vmatpush1.msra.mxu0 0.0
        %909 = vmatprep.subr.mxu0 0.0
        %910 = vmatpush1.msra.mxu0 0.0
        %911 = vmatprep.subr.mxu0 0.0
        %912 = vmatpush1.msra.mxu0 0.0
        %913 = vmatprep.subr.mxu0 0.0
        %914 = vmatpush1.msra.mxu0 0.0
        %915 = vmatprep.subr.mxu0 0.0
        %916 = vmatpush1.msra.mxu0 0.0
        %917 = vmatprep.subr.mxu0 0.0
        %918 = vmatpush1.msra.mxu0 0.0
        %919 = vmatprep.subr.mxu0 0.0
        %920 = vmatpush1.msra.mxu0 0.0
        %921 = vmatprep.subr.mxu0 0.0
        %922 = vmatpush1.msra.mxu0 0.0
        %923 = vmatprep.subr.mxu0 0.0
        %924 = vmatpush1.msra.mxu0 0.0
        %925 = vmatprep.mubr.f32.mxu0 0.0
        %926 = vmatmul.mubr.f32.gmra.mrb[0].mxu0 %v660
        %v927 = vpop.f32.mrb[0].mxu0
        %v928 = vadd.f32 0.0, %v927
        %v929 = vpop.f32.mrb[0].mxu0
        %930 = vmatprep.mubr.f32.mxu0 0.0
        %931 = vmatmul.mubr.f32.gmra.mrb[0].mxu0 %v661
        %v932 = vpop.f32.mrb[0].mxu0
        %v933 = vadd.f32 0.0, %v932
        %v934 = vpop.f32.mrb[0].mxu0
        %935 = vmatprep.mubr.f32.mxu0 0.0
        %936 = vmatmul.mubr.f32.gmra.mrb[0].mxu0 %v662
        %v937 = vpop.f32.mrb[0].mxu0
        %v938 = vadd.f32 0.0, %v937
        %v939 = vpop.f32.mrb[0].mxu0
        %940 = vmatprep.mubr.f32.mxu0 0.0
        %941 = vmatmul.mubr.f32.gmra.mrb[0].mxu0 %v663
        %v942 = vpop.f32.mrb[0].mxu0
        %v943 = vadd.f32 0.0, %v942
        %v944 = vpop.f32.mrb[0].mxu0
        %945 = vmatprep.mubr.f32.mxu0 0.0
        %946 = vmatmul.mubr.f32.gmra.mrb[0].mxu0 %v664
        %v947 = vpop.f32.mrb[0].mxu0
        %v948 = vadd.f32 0.0, %v947
        %v949 = vpop.f32.mrb[0].mxu0
        %950 = vmatprep.mubr.f32.mxu0 0.0
        %951 = vmatmul.mubr.f32.gmra.mrb[0].mxu0 %v665
        %v952 = vpop.f32.mrb[0].mxu0
        %v953 = vadd.f32 0.0, %v952
        %v954 = vpop.f32.mrb[0].mxu0
        %955 = vmatprep.mubr.f32.mxu0 0.0
        %956 = vmatmul.mubr.f32.gmra.mrb[0].mxu0 %v666
        %v957 = vpop.f32.mrb[0].mxu0
        %v958 = vadd.f32 0.0, %v957
        %v959 = vpop.f32.mrb[0].mxu0
        %960 = vmatprep.mubr.f32.mxu0 0.0
        %961 = vmatmul.mubr.f32.gmra.mrb[0].mxu0 %v667
        %v962 = vpop.f32.mrb[0].mxu0
        %v963 = vadd.f32 0.0, %v962
        %v964 = vpop.f32.mrb[0].mxu0
        %965 = vmatprep.mubr.f32.mxu0 0.0
        %966 = vmatmul.mubr.f32.gmra.mrb[0].mxu0 %v668
        %v967 = vpop.f32.mrb[0].mxu0
        %v968 = vadd.f32 0.0, %v967
        %v969 = vpop.f32.mrb[0].mxu0
        %970 = vmatprep.mubr.f32.mxu0 0.0
        %971 = vmatmul.mubr.f32.gmra.mrb[0].mxu0 %v669
        %v972 = vpop.f32.mrb[0].mxu0
        %v973 = vadd.f32 0.0, %v972
        %v974 = vpop.f32.mrb[0].mxu0
        %975 = vmatprep.mubr.f32.mxu0 0.0
        %976 = vmatmul.mubr.f32.gmra.mrb[0].mxu0 %v670
        %v977 = vpop.f32.mrb[0].mxu0
        %v978 = vadd.f32 0.0, %v977
        %v979 = vpop.f32.mrb[0].mxu0
        %980 = vmatprep.mubr.f32.mxu0 0.0
        %981 = vmatmul.mubr.f32.gmra.mrb[0].mxu0 %v671
        %v982 = vpop.f32.mrb[0].mxu0
        %v983 = vadd.f32 0.0, %v982
        %v984 = vpop.f32.mrb[0].mxu0
        %985 = vmatprep.mubr.f32.mxu0 0.0
        %986 = vmatmul.mubr.f32.gmra.mrb[0].mxu0 %v672
        %v987 = vpop.f32.mrb[0].mxu0
        %v988 = vadd.f32 0.0, %v987
        %v989 = vpop.f32.mrb[0].mxu0
        %990 = vmatprep.mubr.f32.mxu0 0.0
        %991 = vmatmul.mubr.f32.gmra.mrb[0].mxu0 %v673
        %v992 = vpop.f32.mrb[0].mxu0
        %v993 = vadd.f32 0.0, %v992
        %v994 = vpop.f32.mrb[0].mxu0
        %995 = vmatprep.mubr.f32.mxu0 0.0
        %996 = vmatmul.mubr.f32.gmra.mrb[0].mxu0 %v674
        %v997 = vpop.f32.mrb[0].mxu0
        %v998 = vadd.f32 0.0, %v997
        %v999 = vpop.f32.mrb[0].mxu0
        %1000 = vmatprep.mubr.f32.mxu0 0.0
        %1001 = vmatmul.mubr.f32.gmra.mrb[0].mxu0 %v675
        %v1002 = vpop.f32.mrb[0].mxu0
        %v1003 = vadd.f32 0.0, %v1002
        %v1004 = vpop.f32.mrb[0].mxu0
        %1005 = vdwg.mxu0
        %vm1006 = vcmp.ge.f32.partialorder %v928, 0.5
        %vm1007 = vcmp.ge.f32.partialorder %v933, 0.5
        %vm1008 = vcmp.ge.f32.partialorder %v938, 0.5
        %vm1009 = vcmp.ge.f32.partialorder %v943, 0.5
        %vm1010 = vcmp.ge.f32.partialorder %v948, 0.5
        %vm1011 = vcmp.ge.f32.partialorder %v953, 0.5
        %vm1012 = vcmp.ge.f32.partialorder %v958, 0.5
        %vm1013 = vcmp.ge.f32.partialorder %v963, 0.5
        %vm1014 = vcmp.ge.f32.partialorder %v968, 0.5
        %vm1015 = vcmp.ge.f32.partialorder %v973, 0.5
        %vm1016 = vcmp.ge.f32.partialorder %v978, 0.5
        %vm1017 = vcmp.ge.f32.partialorder %v983, 0.5
        %vm1018 = vcmp.ge.f32.partialorder %v988, 0.5
        %vm1019 = vcmp.ge.f32.partialorder %v993, 0.5
        %vm1020 = vcmp.ge.f32.partialorder %v998, 0.5
        %vm1021 = vcmp.ge.f32.partialorder %v1003, 0.5
        %v1022 = vsel %vm1006, 1, 0
        %v1023 = vsel %vm1007, 1, 0
        %v1024 = vsel %vm1008, 1, 0
        %v1025 = vsel %vm1009, 1, 0
        %v1026 = vsel %vm1010, 1, 0
        %v1027 = vsel %vm1011, 1, 0
        %v1028 = vsel %vm1012, 1, 0
        %v1029 = vsel %vm1013, 1, 0
        %v1030 = vsel %vm1014, 1, 0
        %v1031 = vsel %vm1015, 1, 0
        %v1032 = vsel %vm1016, 1, 0
        %v1033 = vsel %vm1017, 1, 0
        %v1034 = vsel %vm1018, 1, 0
        %v1035 = vsel %vm1019, 1, 0
        %v1036 = vsel %vm1020, 1, 0
        %v1037 = vsel %vm1021, 1, 0
        %v1038 = vcvt.s32.f32 %v1022
        %v1039 = vcvt.s32.f32 %v1023
        %v1040 = vcvt.s32.f32 %v1024
        %v1041 = vcvt.s32.f32 %v1025
        %v1042 = vcvt.s32.f32 %v1026
        %v1043 = vcvt.s32.f32 %v1027
        %v1044 = vcvt.s32.f32 %v1028
        %v1045 = vcvt.s32.f32 %v1029
        %v1046 = vcvt.s32.f32 %v1030
        %v1047 = vcvt.s32.f32 %v1031
        %v1048 = vcvt.s32.f32 %v1032
        %v1049 = vcvt.s32.f32 %v1033
        %v1050 = vcvt.s32.f32 %v1034
        %v1051 = vcvt.s32.f32 %v1035
        %v1052 = vcvt.s32.f32 %v1036
        %v1053 = vcvt.s32.f32 %v1037
        %v1054 = vpack.c.bf16 %v1039, %v1038
        %v1055 = vpack.c.bf16 %v1041, %v1040
        %v1056 = vpack.c.bf16 %v1043, %v1042
        %v1057 = vpack.c.bf16 %v1045, %v1044
        %v1058 = vpack.c.bf16 %v1047, %v1046
        %v1059 = vpack.c.bf16 %v1049, %v1048
        %v1060 = vpack.c.bf16 %v1051, %v1050
        %v1061 = vpack.c.bf16 %v1053, %v1052
        %v1062 = vld [vmem:[%s378] sm:$0xff]
        %v1063 = vld [vmem:[%s378 + $0x8] sm:$0xff]
        %v1064 = vld [vmem:[%s378 + $0x10] sm:$0xff]
        %v1065 = vld [vmem:[%s378 + $0x18] sm:$0xff]
        %v1066 = vld [vmem:[%s378 + $0x20] sm:$0xff]
        %v1067 = vld [vmem:[%s378 + $0x28] sm:$0xff]
        %v1068 = vld [vmem:[%s378 + $0x30] sm:$0xff]
        %v1069 = vld [vmem:[%s378 + $0x38] sm:$0xff]
        %v1070 = vld [vmem:[%s378 + $0x40] sm:$0xff]
        %v1071 = vld [vmem:[%s378 + $0x48] sm:$0xff]
        %v1072 = vld [vmem:[%s378 + $0x50] sm:$0xff]
        %v1073 = vld [vmem:[%s378 + $0x58] sm:$0xff]
        %v1074 = vld [vmem:[%s378 + $0x60] sm:$0xff]
        %v1075 = vld [vmem:[%s378 + $0x68] sm:$0xff]
        %v1076 = vld [vmem:[%s378 + $0x70] sm:$0xff]
        %v1077 = vld [vmem:[%s378 + $0x78] sm:$0xff]
        %1078 = vxpose.xlu0.c.b16.start [1/8] %v676, 128
        %1079 = vxpose.xlu0.c.b16.cont [2/8] %v677, 128
        %1080 = vxpose.xlu0.c.b16.cont [3/8] %v678, 128
        %1081 = vxpose.xlu0.c.b16.cont [4/8] %v679, 128
        %1082 = vxpose.xlu0.c.b16.cont [5/8] %v680, 128
        %1083 = vxpose.xlu0.c.b16.cont [6/8] %v681, 128
        %1084 = vxpose.xlu0.c.b16.cont [7/8] %v682, 128
        %1085 = vxpose.xlu0.c.b16.end [8/8] %v683, 128
        %v1086 = vpop.trf.xlu0
        %v1087 = vpop.trf.xlu0
        %v1088 = vpop.trf.xlu0
        %v1089 = vpop.trf.xlu0
        %v1090 = vpop.trf.xlu0
        %v1091 = vpop.trf.xlu0
        %v1092 = vpop.trf.xlu0
        %v1093 = vpop.trf.xlu0
        %1094 = vmatprep.subr.bf16.mxu0 0
        %1095 = vmatpush1.bf16.msra.mxu0 %v1054
        %1096 = vmatprep.subr.bf16.mxu0 0
        %1097 = vmatpush1.bf16.msra.mxu0 %v1055
        %1098 = vmatprep.subr.bf16.mxu0 0
        %1099 = vmatpush1.bf16.msra.mxu0 %v1056
        %1100 = vmatprep.subr.bf16.mxu0 0
        %1101 = vmatpush1.bf16.msra.mxu0 %v1057
        %1102 = vmatprep.subr.bf16.mxu0 0
        %1103 = vmatpush1.bf16.msra.mxu0 %v1058
        %1104 = vmatprep.subr.bf16.mxu0 0
        %1105 = vmatpush1.bf16.msra.mxu0 %v1059
        %1106 = vmatprep.subr.bf16.mxu0 0
        %1107 = vmatpush1.bf16.msra.mxu0 %v1060
        %1108 = vmatprep.subr.bf16.mxu0 0
        %1109 = vmatpush1.bf16.msra.mxu0 %v1061
        %1110 = vmatprep.subr.bf16.mxu0 0
        %1111 = vmatpush1.bf16.msra.mxu0 0
        %1112 = vmatprep.subr.bf16.mxu0 0
        %1113 = vmatpush1.bf16.msra.mxu0 0
        %1114 = vmatprep.subr.bf16.mxu0 0
        %1115 = vmatpush1.bf16.msra.mxu0 0
        %1116 = vmatprep.subr.bf16.mxu0 0
        %1117 = vmatpush1.bf16.msra.mxu0 0
        %1118 = vmatprep.subr.bf16.mxu0 0
        %1119 = vmatpush1.bf16.msra.mxu0 0
        %1120 = vmatprep.subr.bf16.mxu0 0
        %1121 = vmatpush1.bf16.msra.mxu0 0
        %1122 = vmatprep.subr.bf16.mxu0 0
        %1123 = vmatpush1.bf16.msra.mxu0 0
        %1124 = vmatprep.subr.bf16.mxu0 0
        %1125 = vmatpush1.bf16.msra.mxu0 0
        %1126 = vmatprep.mubr.bf16.mxu0 0
        %1127 = vmatmul.mubr.bf16.gmra.mrb[0].mxu0 %v1086
        %v1128 = vpop.f32.mrb[0].mxu0
        %v1129 = vadd.f32 0.0, %v1128
        %v1130 = vpop.f32.mrb[0].mxu0
        %v1131 = vpop.f32.mrb[0].mxu0
        %v1132 = vadd.f32 0.0, %v1131
        %v1133 = vpop.f32.mrb[0].mxu0
        %1134 = vmatprep.mubr.bf16.mxu0 0
        %1135 = vmatmul.mubr.bf16.gmra.mrb[0].mxu0 %v1087
        %v1136 = vpop.f32.mrb[0].mxu0
        %v1137 = vadd.f32 0.0, %v1136
        %v1138 = vpop.f32.mrb[0].mxu0
        %v1139 = vpop.f32.mrb[0].mxu0
        %v1140 = vadd.f32 0.0, %v1139
        %v1141 = vpop.f32.mrb[0].mxu0
        %1142 = vmatprep.mubr.bf16.mxu0 0
        %1143 = vmatmul.mubr.bf16.gmra.mrb[0].mxu0 %v1088
        %v1144 = vpop.f32.mrb[0].mxu0
        %v1145 = vadd.f32 0.0, %v1144
        %v1146 = vpop.f32.mrb[0].mxu0
        %v1147 = vpop.f32.mrb[0].mxu0
        %v1148 = vadd.f32 0.0, %v1147
        %v1149 = vpop.f32.mrb[0].mxu0
        %1150 = vmatprep.mubr.bf16.mxu0 0
        %1151 = vmatmul.mubr.bf16.gmra.mrb[0].mxu0 %v1089
        %v1152 = vpop.f32.mrb[0].mxu0
        %v1153 = vadd.f32 0.0, %v1152
        %v1154 = vpop.f32.mrb[0].mxu0
        %v1155 = vpop.f32.mrb[0].mxu0
        %v1156 = vadd.f32 0.0, %v1155
        %v1157 = vpop.f32.mrb[0].mxu0
        %1158 = vmatprep.mubr.bf16.mxu0 0
        %1159 = vmatmul.mubr.bf16.gmra.mrb[0].mxu0 %v1090
        %v1160 = vpop.f32.mrb[0].mxu0
        %v1161 = vadd.f32 0.0, %v1160
        %v1162 = vpop.f32.mrb[0].mxu0
        %v1163 = vpop.f32.mrb[0].mxu0
        %v1164 = vadd.f32 0.0, %v1163
        %v1165 = vpop.f32.mrb[0].mxu0
        %1166 = vmatprep.mubr.bf16.mxu0 0
        %1167 = vmatmul.mubr.bf16.gmra.mrb[0].mxu0 %v1091
        %v1168 = vpop.f32.mrb[0].mxu0
        %v1169 = vadd.f32 0.0, %v1168
        %v1170 = vpop.f32.mrb[0].mxu0
        %v1171 = vpop.f32.mrb[0].mxu0
        %v1172 = vadd.f32 0.0, %v1171
        %v1173 = vpop.f32.mrb[0].mxu0
        %1174 = vmatprep.mubr.bf16.mxu0 0
        %1175 = vmatmul.mubr.bf16.gmra.mrb[0].mxu0 %v1092
        %v1176 = vpop.f32.mrb[0].mxu0
        %v1177 = vadd.f32 0.0, %v1176
        %v1178 = vpop.f32.mrb[0].mxu0
        %v1179 = vpop.f32.mrb[0].mxu0
        %v1180 = vadd.f32 0.0, %v1179
        %v1181 = vpop.f32.mrb[0].mxu0
        %1182 = vmatprep.mubr.bf16.mxu0 0
        %1183 = vmatmul.mubr.bf16.gmra.mrb[0].mxu0 %v1093
        %v1184 = vpop.f32.mrb[0].mxu0
        %v1185 = vadd.f32 0.0, %v1184
        %v1186 = vpop.f32.mrb[0].mxu0
        %v1187 = vpop.f32.mrb[0].mxu0
        %v1188 = vadd.f32 0.0, %v1187
        %v1189 = vpop.f32.mrb[0].mxu0
        %1190 = vdwg.mxu0
        %v1191 = vadd.f32 %v1062, %v1129
        %v1192 = vadd.f32 %v1063, %v1132
        %v1193 = vadd.f32 %v1064, %v1137
        %v1194 = vadd.f32 %v1065, %v1140
        %v1195 = vadd.f32 %v1066, %v1145
        %v1196 = vadd.f32 %v1067, %v1148
        %v1197 = vadd.f32 %v1068, %v1153
        %v1198 = vadd.f32 %v1069, %v1156
        %v1199 = vadd.f32 %v1070, %v1161
        %v1200 = vadd.f32 %v1071, %v1164
        %v1201 = vadd.f32 %v1072, %v1169
        %v1202 = vadd.f32 %v1073, %v1172
        %v1203 = vadd.f32 %v1074, %v1177
        %v1204 = vadd.f32 %v1075, %v1180
        %v1205 = vadd.f32 %v1076, %v1185
        %v1206 = vadd.f32 %v1077, %v1188
        %1207 = vst [vmem:[%s378] sm:$0xff] %v1191
        %1208 = vst [vmem:[%s378 + $0x8] sm:$0xff] %v1192
        %1209 = vst [vmem:[%s378 + $0x10] sm:$0xff] %v1193
        %1210 = vst [vmem:[%s378 + $0x18] sm:$0xff] %v1194
        %1211 = vst [vmem:[%s378 + $0x20] sm:$0xff] %v1195
        %1212 = vst [vmem:[%s378 + $0x28] sm:$0xff] %v1196
        %1213 = vst [vmem:[%s378 + $0x30] sm:$0xff] %v1197
        %1214 = vst [vmem:[%s378 + $0x38] sm:$0xff] %v1198
        %1215 = vst [vmem:[%s378 + $0x40] sm:$0xff] %v1199
        %1216 = vst [vmem:[%s378 + $0x48] sm:$0xff] %v1200
        %1217 = vst [vmem:[%s378 + $0x50] sm:$0xff] %v1201
        %1218 = vst [vmem:[%s378 + $0x58] sm:$0xff] %v1202
        %1219 = vst [vmem:[%s378 + $0x60] sm:$0xff] %v1203
        %1220 = vst [vmem:[%s378 + $0x68] sm:$0xff] %v1204
        %1221 = vst [vmem:[%s378 + $0x70] sm:$0xff] %v1205
        %1222 = vst [vmem:[%s378 + $0x78] sm:$0xff] %v1206
        %v1223 = vld [vmem:[#allocation8] sm:$0xff]
        %v1224 = vld [vmem:[#allocation8 + $0x8] sm:$0xff]
        %v1225 = vld [vmem:[#allocation8 + $0x10] sm:$0xff]
        %v1226 = vld [vmem:[#allocation8 + $0x18] sm:$0xff]
        %v1227 = vld [vmem:[#allocation8 + $0x20] sm:$0xff]
        %v1228 = vld [vmem:[#allocation8 + $0x28] sm:$0xff]
        %v1229 = vld [vmem:[#allocation8 + $0x30] sm:$0xff]
        %v1230 = vld [vmem:[#allocation8 + $0x38] sm:$0xff]
        %v1231 = vld [vmem:[#allocation8 + $0x40] sm:$0xff]
        %v1232 = vld [vmem:[#allocation8 + $0x48] sm:$0xff]
        %v1233 = vld [vmem:[#allocation8 + $0x50] sm:$0xff]
        %v1234 = vld [vmem:[#allocation8 + $0x58] sm:$0xff]
        %v1235 = vld [vmem:[#allocation8 + $0x60] sm:$0xff]
        %v1236 = vld [vmem:[#allocation8 + $0x68] sm:$0xff]
        %v1237 = vld [vmem:[#allocation8 + $0x70] sm:$0xff]
        %v1238 = vld [vmem:[#allocation8 + $0x78] sm:$0xff]
        %1239 = vmatprep.subr.mxu0 0.0
        %1240 = vmatpush1.msra.mxu0 %v1223
        %1241 = vmatprep.subr.mxu0 0.0
        %1242 = vmatpush1.msra.mxu0 %v1224
        %1243 = vmatprep.subr.mxu0 0.0
        %1244 = vmatpush1.msra.mxu0 %v1225
        %1245 = vmatprep.subr.mxu0 0.0
        %1246 = vmatpush1.msra.mxu0 %v1226
        %1247 = vmatprep.subr.mxu0 0.0
        %1248 = vmatpush1.msra.mxu0 %v1227
        %1249 = vmatprep.subr.mxu0 0.0
        %1250 = vmatpush1.msra.mxu0 %v1228
        %1251 = vmatprep.subr.mxu0 0.0
        %1252 = vmatpush1.msra.mxu0 %v1229
        %1253 = vmatprep.subr.mxu0 0.0
        %1254 = vmatpush1.msra.mxu0 %v1230
        %1255 = vmatprep.subr.mxu0 0.0
        %1256 = vmatpush1.msra.mxu0 %v1231
        %1257 = vmatprep.subr.mxu0 0.0
        %1258 = vmatpush1.msra.mxu0 %v1232
        %1259 = vmatprep.subr.mxu0 0.0
        %1260 = vmatpush1.msra.mxu0 %v1233
        %1261 = vmatprep.subr.mxu0 0.0
        %1262 = vmatpush1.msra.mxu0 %v1234
        %1263 = vmatprep.subr.mxu0 0.0
        %1264 = vmatpush1.msra.mxu0 %v1235
        %1265 = vmatprep.subr.mxu0 0.0
        %1266 = vmatpush1.msra.mxu0 %v1236
        %1267 = vmatprep.subr.mxu0 0.0
        %1268 = vmatpush1.msra.mxu0 %v1237
        %1269 = vmatprep.subr.mxu0 0.0
        %1270 = vmatpush1.msra.mxu0 %v1238
        %1271 = vmatprep.subr.mxu0 0.0
        %1272 = vmatpush1.msra.mxu0 0.0
        %1273 = vmatprep.subr.mxu0 0.0
        %1274 = vmatpush1.msra.mxu0 0.0
        %1275 = vmatprep.subr.mxu0 0.0
        %1276 = vmatpush1.msra.mxu0 0.0
        %1277 = vmatprep.subr.mxu0 0.0
        %1278 = vmatpush1.msra.mxu0 0.0
        %1279 = vmatprep.subr.mxu0 0.0
        %1280 = vmatpush1.msra.mxu0 0.0
        %1281 = vmatprep.subr.mxu0 0.0
        %1282 = vmatpush1.msra.mxu0 0.0
        %1283 = vmatprep.subr.mxu0 0.0
        %1284 = vmatpush1.msra.mxu0 0.0
        %1285 = vmatprep.subr.mxu0 0.0
        %1286 = vmatpush1.msra.mxu0 0.0
        %1287 = vmatprep.subr.mxu0 0.0
        %1288 = vmatpush1.msra.mxu0 0.0
        %1289 = vmatprep.subr.mxu0 0.0
        %1290 = vmatpush1.msra.mxu0 0.0
        %1291 = vmatprep.subr.mxu0 0.0
        %1292 = vmatpush1.msra.mxu0 0.0
        %1293 = vmatprep.subr.mxu0 0.0
        %1294 = vmatpush1.msra.mxu0 0.0
        %1295 = vmatprep.subr.mxu0 0.0
        %1296 = vmatpush1.msra.mxu0 0.0
        %1297 = vmatprep.subr.mxu0 0.0
        %1298 = vmatpush1.msra.mxu0 0.0
        %1299 = vmatprep.subr.mxu0 0.0
        %1300 = vmatpush1.msra.mxu0 0.0
        %1301 = vmatprep.subr.mxu0 0.0
        %1302 = vmatpush1.msra.mxu0 0.0
        %1303 = vmatprep.mubr.f32.mxu0 0.0
        %1304 = vmatmul.mubr.f32.gmra.mrb[0].mxu0 %v1038
        %v1305 = vpop.f32.mrb[0].mxu0
        %v1306 = vadd.f32 0.0, %v1305
        %v1307 = vpop.f32.mrb[0].mxu0
        %1308 = vmatprep.mubr.f32.mxu0 0.0
        %1309 = vmatmul.mubr.f32.gmra.mrb[0].mxu0 %v1039
        %v1310 = vpop.f32.mrb[0].mxu0
        %v1311 = vadd.f32 0.0, %v1310
        %v1312 = vpop.f32.mrb[0].mxu0
        %1313 = vmatprep.mubr.f32.mxu0 0.0
        %1314 = vmatmul.mubr.f32.gmra.mrb[0].mxu0 %v1040
        %v1315 = vpop.f32.mrb[0].mxu0
        %v1316 = vadd.f32 0.0, %v1315
        %v1317 = vpop.f32.mrb[0].mxu0
        %1318 = vmatprep.mubr.f32.mxu0 0.0
        %1319 = vmatmul.mubr.f32.gmra.mrb[0].mxu0 %v1041
        %v1320 = vpop.f32.mrb[0].mxu0
        %v1321 = vadd.f32 0.0, %v1320
        %v1322 = vpop.f32.mrb[0].mxu0
        %1323 = vmatprep.mubr.f32.mxu0 0.0
        %1324 = vmatmul.mubr.f32.gmra.mrb[0].mxu0 %v1042
        %v1325 = vpop.f32.mrb[0].mxu0
        %v1326 = vadd.f32 0.0, %v1325
        %v1327 = vpop.f32.mrb[0].mxu0
        %1328 = vmatprep.mubr.f32.mxu0 0.0
        %1329 = vmatmul.mubr.f32.gmra.mrb[0].mxu0 %v1043
        %v1330 = vpop.f32.mrb[0].mxu0
        %v1331 = vadd.f32 0.0, %v1330
        %v1332 = vpop.f32.mrb[0].mxu0
        %1333 = vmatprep.mubr.f32.mxu0 0.0
        %1334 = vmatmul.mubr.f32.gmra.mrb[0].mxu0 %v1044
        %v1335 = vpop.f32.mrb[0].mxu0
        %v1336 = vadd.f32 0.0, %v1335
        %v1337 = vpop.f32.mrb[0].mxu0
        %1338 = vmatprep.mubr.f32.mxu0 0.0
        %1339 = vmatmul.mubr.f32.gmra.mrb[0].mxu0 %v1045
        %v1340 = vpop.f32.mrb[0].mxu0
        %v1341 = vadd.f32 0.0, %v1340
        %v1342 = vpop.f32.mrb[0].mxu0
        %1343 = vmatprep.mubr.f32.mxu0 0.0
        %1344 = vmatmul.mubr.f32.gmra.mrb[0].mxu0 %v1046
        %v1345 = vpop.f32.mrb[0].mxu0
        %v1346 = vadd.f32 0.0, %v1345
        %v1347 = vpop.f32.mrb[0].mxu0
        %1348 = vmatprep.mubr.f32.mxu0 0.0
        %1349 = vmatmul.mubr.f32.gmra.mrb[0].mxu0 %v1047
        %v1350 = vpop.f32.mrb[0].mxu0
        %v1351 = vadd.f32 0.0, %v1350
        %v1352 = vpop.f32.mrb[0].mxu0
        %1353 = vmatprep.mubr.f32.mxu0 0.0
        %1354 = vmatmul.mubr.f32.gmra.mrb[0].mxu0 %v1048
        %v1355 = vpop.f32.mrb[0].mxu0
        %v1356 = vadd.f32 0.0, %v1355
        %v1357 = vpop.f32.mrb[0].mxu0
        %1358 = vmatprep.mubr.f32.mxu0 0.0
        %1359 = vmatmul.mubr.f32.gmra.mrb[0].mxu0 %v1049
        %v1360 = vpop.f32.mrb[0].mxu0
        %v1361 = vadd.f32 0.0, %v1360
        %v1362 = vpop.f32.mrb[0].mxu0
        %1363 = vmatprep.mubr.f32.mxu0 0.0
        %1364 = vmatmul.mubr.f32.gmra.mrb[0].mxu0 %v1050
        %v1365 = vpop.f32.mrb[0].mxu0
        %v1366 = vadd.f32 0.0, %v1365
        %v1367 = vpop.f32.mrb[0].mxu0
        %1368 = vmatprep.mubr.f32.mxu0 0.0
        %1369 = vmatmul.mubr.f32.gmra.mrb[0].mxu0 %v1051
        %v1370 = vpop.f32.mrb[0].mxu0
        %v1371 = vadd.f32 0.0, %v1370
        %v1372 = vpop.f32.mrb[0].mxu0
        %1373 = vmatprep.mubr.f32.mxu0 0.0
        %1374 = vmatmul.mubr.f32.gmra.mrb[0].mxu0 %v1052
        %v1375 = vpop.f32.mrb[0].mxu0
        %v1376 = vadd.f32 0.0, %v1375
        %v1377 = vpop.f32.mrb[0].mxu0
        %1378 = vmatprep.mubr.f32.mxu0 0.0
        %1379 = vmatmul.mubr.f32.gmra.mrb[0].mxu0 %v1053
        %v1380 = vpop.f32.mrb[0].mxu0
        %v1381 = vadd.f32 0.0, %v1380
        %v1382 = vpop.f32.mrb[0].mxu0
        %1383 = vdwg.mxu0
        %vm1384 = vcmp.ge.f32.partialorder %v1306, 0.5
        %vm1385 = vcmp.ge.f32.partialorder %v1311, 0.5
        %vm1386 = vcmp.ge.f32.partialorder %v1316, 0.5
        %vm1387 = vcmp.ge.f32.partialorder %v1321, 0.5
        %vm1388 = vcmp.ge.f32.partialorder %v1326, 0.5
        %vm1389 = vcmp.ge.f32.partialorder %v1331, 0.5
        %vm1390 = vcmp.ge.f32.partialorder %v1336, 0.5
        %vm1391 = vcmp.ge.f32.partialorder %v1341, 0.5
        %vm1392 = vcmp.ge.f32.partialorder %v1346, 0.5
        %vm1393 = vcmp.ge.f32.partialorder %v1351, 0.5
        %vm1394 = vcmp.ge.f32.partialorder %v1356, 0.5
        %vm1395 = vcmp.ge.f32.partialorder %v1361, 0.5
        %vm1396 = vcmp.ge.f32.partialorder %v1366, 0.5
        %vm1397 = vcmp.ge.f32.partialorder %v1371, 0.5
        %vm1398 = vcmp.ge.f32.partialorder %v1376, 0.5
        %vm1399 = vcmp.ge.f32.partialorder %v1381, 0.5
        %v1400 = vsel %vm1384, 1, 0
        %v1401 = vsel %vm1385, 1, 0
        %v1402 = vsel %vm1386, 1, 0
        %v1403 = vsel %vm1387, 1, 0
        %v1404 = vsel %vm1388, 1, 0
        %v1405 = vsel %vm1389, 1, 0
        %v1406 = vsel %vm1390, 1, 0
        %v1407 = vsel %vm1391, 1, 0
        %v1408 = vsel %vm1392, 1, 0
        %v1409 = vsel %vm1393, 1, 0
        %v1410 = vsel %vm1394, 1, 0
        %v1411 = vsel %vm1395, 1, 0
        %v1412 = vsel %vm1396, 1, 0
        %v1413 = vsel %vm1397, 1, 0
        %v1414 = vsel %vm1398, 1, 0
        %v1415 = vsel %vm1399, 1, 0
        %v1416 = vcvt.s32.f32 %v1400
        %v1417 = vcvt.s32.f32 %v1401
        %v1418 = vcvt.s32.f32 %v1402
        %v1419 = vcvt.s32.f32 %v1403
        %v1420 = vcvt.s32.f32 %v1404
        %v1421 = vcvt.s32.f32 %v1405
        %v1422 = vcvt.s32.f32 %v1406
        %v1423 = vcvt.s32.f32 %v1407
        %v1424 = vcvt.s32.f32 %v1408
        %v1425 = vcvt.s32.f32 %v1409
        %v1426 = vcvt.s32.f32 %v1410
        %v1427 = vcvt.s32.f32 %v1411
        %v1428 = vcvt.s32.f32 %v1412
        %v1429 = vcvt.s32.f32 %v1413
        %v1430 = vcvt.s32.f32 %v1414
        %v1431 = vcvt.s32.f32 %v1415
        %v1432 = vpack.c.bf16 %v1417, %v1416
        %v1433 = vpack.c.bf16 %v1419, %v1418
        %v1434 = vpack.c.bf16 %v1421, %v1420
        %v1435 = vpack.c.bf16 %v1423, %v1422
        %v1436 = vpack.c.bf16 %v1425, %v1424
        %v1437 = vpack.c.bf16 %v1427, %v1426
        %v1438 = vpack.c.bf16 %v1429, %v1428
        %v1439 = vpack.c.bf16 %v1431, %v1430
        %v1440 = vld [vmem:[%s385] sm:$0xff]
        %v1441 = vld [vmem:[%s385 + $0x8] sm:$0xff]
        %v1442 = vld [vmem:[%s385 + $0x10] sm:$0xff]
        %v1443 = vld [vmem:[%s385 + $0x18] sm:$0xff]
        %v1444 = vld [vmem:[%s385 + $0x20] sm:$0xff]
        %v1445 = vld [vmem:[%s385 + $0x28] sm:$0xff]
        %v1446 = vld [vmem:[%s385 + $0x30] sm:$0xff]
        %v1447 = vld [vmem:[%s385 + $0x38] sm:$0xff]
        %v1448 = vld [vmem:[%s385 + $0x40] sm:$0xff]
        %v1449 = vld [vmem:[%s385 + $0x48] sm:$0xff]
        %v1450 = vld [vmem:[%s385 + $0x50] sm:$0xff]
        %v1451 = vld [vmem:[%s385 + $0x58] sm:$0xff]
        %v1452 = vld [vmem:[%s385 + $0x60] sm:$0xff]
        %v1453 = vld [vmem:[%s385 + $0x68] sm:$0xff]
        %v1454 = vld [vmem:[%s385 + $0x70] sm:$0xff]
        %v1455 = vld [vmem:[%s385 + $0x78] sm:$0xff]
        %1456 = vxpose.xlu0.c.b16.start [1/8] %v1054, 128
        %1457 = vxpose.xlu0.c.b16.cont [2/8] %v1055, 128
        %1458 = vxpose.xlu0.c.b16.cont [3/8] %v1056, 128
        %1459 = vxpose.xlu0.c.b16.cont [4/8] %v1057, 128
        %1460 = vxpose.xlu0.c.b16.cont [5/8] %v1058, 128
        %1461 = vxpose.xlu0.c.b16.cont [6/8] %v1059, 128
        %1462 = vxpose.xlu0.c.b16.cont [7/8] %v1060, 128
        %1463 = vxpose.xlu0.c.b16.end [8/8] %v1061, 128
        %v1464 = vpop.trf.xlu0
        %v1465 = vpop.trf.xlu0
        %v1466 = vpop.trf.xlu0
        %v1467 = vpop.trf.xlu0
        %v1468 = vpop.trf.xlu0
        %v1469 = vpop.trf.xlu0
        %v1470 = vpop.trf.xlu0
        %v1471 = vpop.trf.xlu0
        %1472 = vmatprep.subr.bf16.mxu0 0
        %1473 = vmatpush1.bf16.msra.mxu0 %v1432
        %1474 = vmatprep.subr.bf16.mxu0 0
        %1475 = vmatpush1.bf16.msra.mxu0 %v1433
        %1476 = vmatprep.subr.bf16.mxu0 0
        %1477 = vmatpush1.bf16.msra.mxu0 %v1434
        %1478 = vmatprep.subr.bf16.mxu0 0
        %1479 = vmatpush1.bf16.msra.mxu0 %v1435
        %1480 = vmatprep.subr.bf16.mxu0 0
        %1481 = vmatpush1.bf16.msra.mxu0 %v1436
        %1482 = vmatprep.subr.bf16.mxu0 0
        %1483 = vmatpush1.bf16.msra.mxu0 %v1437
        %1484 = vmatprep.subr.bf16.mxu0 0
        %1485 = vmatpush1.bf16.msra.mxu0 %v1438
        %1486 = vmatprep.subr.bf16.mxu0 0
        %1487 = vmatpush1.bf16.msra.mxu0 %v1439
        %1488 = vmatprep.subr.bf16.mxu0 0
        %1489 = vmatpush1.bf16.msra.mxu0 0
        %1490 = vmatprep.subr.bf16.mxu0 0
        %1491 = vmatpush1.bf16.msra.mxu0 0
        %1492 = vmatprep.subr.bf16.mxu0 0
        %1493 = vmatpush1.bf16.msra.mxu0 0
        %1494 = vmatprep.subr.bf16.mxu0 0
        %1495 = vmatpush1.bf16.msra.mxu0 0
        %1496 = vmatprep.subr.bf16.mxu0 0
        %1497 = vmatpush1.bf16.msra.mxu0 0
        %1498 = vmatprep.subr.bf16.mxu0 0
        %1499 = vmatpush1.bf16.msra.mxu0 0
        %1500 = vmatprep.subr.bf16.mxu0 0
        %1501 = vmatpush1.bf16.msra.mxu0 0
        %1502 = vmatprep.subr.bf16.mxu0 0
        %1503 = vmatpush1.bf16.msra.mxu0 0
        %1504 = vmatprep.mubr.bf16.mxu0 0
        %1505 = vmatmul.mubr.bf16.gmra.mrb[0].mxu0 %v1464
        %v1506 = vpop.f32.mrb[0].mxu0
        %v1507 = vadd.f32 0.0, %v1506
        %v1508 = vpop.f32.mrb[0].mxu0
        %v1509 = vpop.f32.mrb[0].mxu0
        %v1510 = vadd.f32 0.0, %v1509
        %v1511 = vpop.f32.mrb[0].mxu0
        %1512 = vmatprep.mubr.bf16.mxu0 0
        %1513 = vmatmul.mubr.bf16.gmra.mrb[0].mxu0 %v1465
        %v1514 = vpop.f32.mrb[0].mxu0
        %v1515 = vadd.f32 0.0, %v1514
        %v1516 = vpop.f32.mrb[0].mxu0
        %v1517 = vpop.f32.mrb[0].mxu0
        %v1518 = vadd.f32 0.0, %v1517
        %v1519 = vpop.f32.mrb[0].mxu0
        %1520 = vmatprep.mubr.bf16.mxu0 0
        %1521 = vmatmul.mubr.bf16.gmra.mrb[0].mxu0 %v1466
        %v1522 = vpop.f32.mrb[0].mxu0
        %v1523 = vadd.f32 0.0, %v1522
        %v1524 = vpop.f32.mrb[0].mxu0
        %v1525 = vpop.f32.mrb[0].mxu0
        %v1526 = vadd.f32 0.0, %v1525
        %v1527 = vpop.f32.mrb[0].mxu0
        %1528 = vmatprep.mubr.bf16.mxu0 0
        %1529 = vmatmul.mubr.bf16.gmra.mrb[0].mxu0 %v1467
        %v1530 = vpop.f32.mrb[0].mxu0
        %v1531 = vadd.f32 0.0, %v1530
        %v1532 = vpop.f32.mrb[0].mxu0
        %v1533 = vpop.f32.mrb[0].mxu0
        %v1534 = vadd.f32 0.0, %v1533
        %v1535 = vpop.f32.mrb[0].mxu0
        %1536 = vmatprep.mubr.bf16.mxu0 0
        %1537 = vmatmul.mubr.bf16.gmra.mrb[0].mxu0 %v1468
        %v1538 = vpop.f32.mrb[0].mxu0
        %v1539 = vadd.f32 0.0, %v1538
        %v1540 = vpop.f32.mrb[0].mxu0
        %v1541 = vpop.f32.mrb[0].mxu0
        %v1542 = vadd.f32 0.0, %v1541
        %v1543 = vpop.f32.mrb[0].mxu0
        %1544 = vmatprep.mubr.bf16.mxu0 0
        %1545 = vmatmul.mubr.bf16.gmra.mrb[0].mxu0 %v1469
        %v1546 = vpop.f32.mrb[0].mxu0
        %v1547 = vadd.f32 0.0, %v1546
        %v1548 = vpop.f32.mrb[0].mxu0
        %v1549 = vpop.f32.mrb[0].mxu0
        %v1550 = vadd.f32 0.0, %v1549
        %v1551 = vpop.f32.mrb[0].mxu0
        %1552 = vmatprep.mubr.bf16.mxu0 0
        %1553 = vmatmul.mubr.bf16.gmra.mrb[0].mxu0 %v1470
        %v1554 = vpop.f32.mrb[0].mxu0
        %v1555 = vadd.f32 0.0, %v1554
        %v1556 = vpop.f32.mrb[0].mxu0
        %v1557 = vpop.f32.mrb[0].mxu0
        %v1558 = vadd.f32 0.0, %v1557
        %v1559 = vpop.f32.mrb[0].mxu0
        %1560 = vmatprep.mubr.bf16.mxu0 0
        %1561 = vmatmul.mubr.bf16.gmra.mrb[0].mxu0 %v1471
        %v1562 = vpop.f32.mrb[0].mxu0
        %v1563 = vadd.f32 0.0, %v1562
        %v1564 = vpop.f32.mrb[0].mxu0
        %v1565 = vpop.f32.mrb[0].mxu0
        %v1566 = vadd.f32 0.0, %v1565
        %v1567 = vpop.f32.mrb[0].mxu0
        %1568 = vdwg.mxu0
        %v1569 = vadd.f32 %v1440, %v1507
        %v1570 = vadd.f32 %v1441, %v1510
        %v1571 = vadd.f32 %v1442, %v1515
        %v1572 = vadd.f32 %v1443, %v1518
        %v1573 = vadd.f32 %v1444, %v1523
        %v1574 = vadd.f32 %v1445, %v1526
        %v1575 = vadd.f32 %v1446, %v1531
        %v1576 = vadd.f32 %v1447, %v1534
        %v1577 = vadd.f32 %v1448, %v1539
        %v1578 = vadd.f32 %v1449, %v1542
        %v1579 = vadd.f32 %v1450, %v1547
        %v1580 = vadd.f32 %v1451, %v1550
        %v1581 = vadd.f32 %v1452, %v1555
        %v1582 = vadd.f32 %v1453, %v1558
        %v1583 = vadd.f32 %v1454, %v1563
        %v1584 = vadd.f32 %v1455, %v1566
        %1585 = vst [vmem:[%s385] sm:$0xff] %v1569
        %1586 = vst [vmem:[%s385 + $0x8] sm:$0xff] %v1570
        %1587 = vst [vmem:[%s385 + $0x10] sm:$0xff] %v1571
        %1588 = vst [vmem:[%s385 + $0x18] sm:$0xff] %v1572
        %1589 = vst [vmem:[%s385 + $0x20] sm:$0xff] %v1573
        %1590 = vst [vmem:[%s385 + $0x28] sm:$0xff] %v1574
        %1591 = vst [vmem:[%s385 + $0x30] sm:$0xff] %v1575
        %1592 = vst [vmem:[%s385 + $0x38] sm:$0xff] %v1576
        %1593 = vst [vmem:[%s385 + $0x40] sm:$0xff] %v1577
        %1594 = vst [vmem:[%s385 + $0x48] sm:$0xff] %v1578
        %1595 = vst [vmem:[%s385 + $0x50] sm:$0xff] %v1579
        %1596 = vst [vmem:[%s385 + $0x58] sm:$0xff] %v1580
        %1597 = vst [vmem:[%s385 + $0x60] sm:$0xff] %v1581
        %1598 = vst [vmem:[%s385 + $0x68] sm:$0xff] %v1582
        %1599 = vst [vmem:[%s385 + $0x70] sm:$0xff] %v1583
        %1600 = vst [vmem:[%s385 + $0x78] sm:$0xff] %v1584
        %1601 = vst [vmem:[%s364] sm:$0xff] %v1416
        %1602 = vst [vmem:[%s364 + $0x8] sm:$0xff] %v1417
        %1603 = vst [vmem:[%s364 + $0x10] sm:$0xff] %v1418
        %1604 = vst [vmem:[%s364 + $0x18] sm:$0xff] %v1419
        %1605 = vst [vmem:[%s364 + $0x20] sm:$0xff] %v1420
        %1606 = vst [vmem:[%s364 + $0x28] sm:$0xff] %v1421
        %1607 = vst [vmem:[%s364 + $0x30] sm:$0xff] %v1422
        %1608 = vst [vmem:[%s364 + $0x38] sm:$0xff] %v1423
        %1609 = vst [vmem:[%s364 + $0x40] sm:$0xff] %v1424
        %1610 = vst [vmem:[%s364 + $0x48] sm:$0xff] %v1425
        %1611 = vst [vmem:[%s364 + $0x50] sm:$0xff] %v1426
        %1612 = vst [vmem:[%s364 + $0x58] sm:$0xff] %v1427
        %1613 = vst [vmem:[%s364 + $0x60] sm:$0xff] %v1428
        %1614 = vst [vmem:[%s364 + $0x68] sm:$0xff] %v1429
        %1615 = vst [vmem:[%s364 + $0x70] sm:$0xff] %v1430
        %1616 = vst [vmem:[%s364 + $0x78] sm:$0xff] %v1431
        %s1617 = sand.u32 %s146, 1
        %s1618 = scalar_lea.sflag [#allocation4], %s1617
        %s1619 = sand.u32 %s146, 1
        %s1620 = smul.addr %s1619, 128
        %s1621 = scalar_lea.vmem [#allocation10], %s1620
        %s1622 = sand.u32 %s33, 1
        %s1623 = scalar_lea.sflag [#allocation12], %s1622
        %s1624 = sand.u32 %s172, 1
        %s1625 = smul.addr %s1624, 128
        %s1626 = scalar_lea.vmem [#allocation11], %s1625
        %s1627 = sand.u32 %s33, 1
        %s1628 = scalar_lea.sflag [#allocation12], %s1627
        %s1629 = sand.u32 %s198, 1
        %s1630 = smul.addr %s1629, 128
        %s1631 = scalar_lea.vmem [#allocation13], %s1630
        %s1632 = sand.u32 %s224, 1
        %s1633 = scalar_lea.sflag [#allocation15], %s1632
        %s1634 = sand.u32 %s224, 1
        %s1635 = smul.addr %s1634, 128
        %s1636 = scalar_lea.vmem [#allocation14], %s1635
        // Predicated region
        $region57: #{tpu_custom_call.1} parent=35 // pred_check
          %p1637 = pneg %p156
        $region58: #{tpu_custom_call.1} parent=35 // pred_check_branch
          %1639 = sbr.rel (%p1637) target = $region60
        $region59: #{tpu_custom_call.1} parent=35 // pred_region
          %s1640 = sadd.s32 %s37, %s38
          %s1641 = smul.u32 16, %s1640
          %s1643 = ssub.s32 2048, 2048
          %1644 = vsyncadd %s1618, %s1643
          %s1645 = smul.addr %s1641, 128
          %s1646 = scalar_lea.hbm %s4, %s1645
          %s1647 = sshll.u32 %s1621, 4
          %s1648 = int_to_ptr.vmem [resolvable:$true] %s1647
          %1653 = dma.vmem_to_hbm [thread:$0]  %s1648, 2048, %s1646, %s1618, 128, 128, 8
        $region60: #{tpu_custom_call.1} parent=35 // pred_fallthru
          _
        // Predicated region
        $region61: #{tpu_custom_call.1} parent=35 // pred_check
          %p1654 = pneg %p182
        $region62: #{tpu_custom_call.1} parent=35 // pred_check_branch
          %1656 = sbr.rel (%p1654) target = $region64
        $region63: #{tpu_custom_call.1} parent=35 // pred_region
          %s1658 = ssub.s32 2048, 2048
          %1659 = vsyncadd %s1623, %s1658
          %s1660 = smul.addr %s37, 16
          %s1661 = smul.addr %s1660, 128
          %s1662 = scalar_lea.hbm %s5, %s1661
          %s1663 = sshll.u32 %s1626, 4
          %s1664 = int_to_ptr.vmem [resolvable:$true] %s1663
          %1669 = dma.vmem_to_hbm [thread:$0]  %s1664, 2048, %s1662, %s1623, 128, 128, 8
        $region64: #{tpu_custom_call.1} parent=35 // pred_fallthru
          _
        // Predicated region
        $region65: #{tpu_custom_call.1} parent=35 // pred_check
          %p1670 = pneg %p208
        $region66: #{tpu_custom_call.1} parent=35 // pred_check_branch
          %1672 = sbr.rel (%p1670) target = $region68
        $region67: #{tpu_custom_call.1} parent=35 // pred_region
          %s1674 = ssub.s32 2048, 2048
          %1675 = vsyncadd %s1628, %s1674
          %s1676 = smul.addr %s37, 16
          %s1677 = smul.addr %s1676, 128
          %s1678 = scalar_lea.hbm %s6, %s1677
          %s1679 = sshll.u32 %s1631, 4
          %s1680 = int_to_ptr.vmem [resolvable:$true] %s1679
          %1685 = dma.vmem_to_hbm [thread:$0]  %s1680, 2048, %s1678, %s1628, 128, 128, 8
        $region68: #{tpu_custom_call.1} parent=35 // pred_fallthru
          _
        // Predicated region
        $region69: #{tpu_custom_call.1} parent=35 // pred_check
          %p1686 = pneg %p234
        $region70: #{tpu_custom_call.1} parent=35 // pred_check_branch
          %1688 = sbr.rel (%p1686) target = $region72
        $region71: #{tpu_custom_call.1} parent=35 // pred_region
          %s1690 = ssub.s32 2048, 2048
          %1691 = vsyncadd %s1633, %s1690
          %s1692 = smul.addr %s37, 16
          %s1693 = smul.addr %s1692, 128
          %s1694 = scalar_lea.hbm %s7, %s1693
          %s1695 = sshll.u32 %s1636, 4
          %s1696 = int_to_ptr.vmem [resolvable:$true] %s1695
          %1701 = dma.vmem_to_hbm [thread:$0]  %s1696, 2048, %s1694, %s1633, 128, 128, 8
        $region72: #{tpu_custom_call.1} parent=35 // pred_fallthru
          _
      $region36: #{tpu_custom_call.1} parent=5 // pred_fallthru
        _
      %p1702 = scmp.le.s32.totalorder 2, %s28
      // Predicated region
      $region73: #{tpu_custom_call.1} parent=5 // pred_check
        %p1703 = pneg %p1702
      $region74: #{tpu_custom_call.1} parent=5 // pred_check_branch
        %1705 = sbr.rel (%p1703) target = $region76
      $region75: #{tpu_custom_call.1} parent=5 // pred_region
        %s1706 = ssub.s32 %s28, 2
        // Predicated region
        $region77: #{tpu_custom_call.1} parent=75 // pred_check
          %p1707 = pneg %p162
        $region78: #{tpu_custom_call.1} parent=75 // pred_check_branch
          %1709 = sbr.rel (%p1707) target = $region80
        $region79: #{tpu_custom_call.1} parent=75 // pred_region
          %s1710 = sand.u32 %s147, 1
          %s1711 = scalar_lea.sflag [#allocation4], %s1710
          %s1712 = sand.u32 %s147, 1
          %s1713 = smul.addr %s1712, 128
          %s1714 = scalar_lea.vmem [#allocation10], %s1713
          %1715 = dma.done %s1711, 2048
        $region80: #{tpu_custom_call.1} parent=75 // pred_fallthru
          _
        // Predicated region
        $region81: #{tpu_custom_call.1} parent=75 // pred_check
          %p1716 = pneg %p188
        $region82: #{tpu_custom_call.1} parent=75 // pred_check_branch
          %1718 = sbr.rel (%p1716) target = $region84
        $region83: #{tpu_custom_call.1} parent=75 // pred_region
          %s1719 = sand.u32 %s34, 1
          %s1720 = scalar_lea.sflag [#allocation12], %s1719
          %s1721 = sand.u32 %s173, 1
          %s1722 = smul.addr %s1721, 128
          %s1723 = scalar_lea.vmem [#allocation11], %s1722
          %1724 = dma.done %s1720, 2048
        $region84: #{tpu_custom_call.1} parent=75 // pred_fallthru
          _
        // Predicated region
        $region85: #{tpu_custom_call.1} parent=75 // pred_check
          %p1725 = pneg %p214
        $region86: #{tpu_custom_call.1} parent=75 // pred_check_branch
          %1727 = sbr.rel (%p1725) target = $region88
        $region87: #{tpu_custom_call.1} parent=75 // pred_region
          %s1728 = sand.u32 %s34, 1
          %s1729 = scalar_lea.sflag [#allocation12], %s1728
          %s1730 = sand.u32 %s199, 1
          %s1731 = smul.addr %s1730, 128
          %s1732 = scalar_lea.vmem [#allocation13], %s1731
          %1733 = dma.done %s1729, 2048
        $region88: #{tpu_custom_call.1} parent=75 // pred_fallthru
          _
        // Predicated region
        $region89: #{tpu_custom_call.1} parent=75 // pred_check
          %p1734 = pneg %p240
        $region90: #{tpu_custom_call.1} parent=75 // pred_check_branch
          %1736 = sbr.rel (%p1734) target = $region92
        $region91: #{tpu_custom_call.1} parent=75 // pred_region
          %s1737 = sand.u32 %s225, 1
          %s1738 = scalar_lea.sflag [#allocation15], %s1737
          %s1739 = sand.u32 %s225, 1
          %s1740 = smul.addr %s1739, 128
          %s1741 = scalar_lea.vmem [#allocation14], %s1740
          %1742 = dma.done %s1738, 2048
        $region92: #{tpu_custom_call.1} parent=75 // pred_fallthru
          _
      $region76: #{tpu_custom_call.1} parent=5 // pred_fallthru
        _
    $region6: #{tpu_custom_call.1} parent=1 // loop_footer
      %s32 = sadd.s32 1, %s28
    $region7: #{tpu_custom_call.1} parent=1 // loop_footer_branch
      %27 = sbr.rel target = $region3
    $region8: #{tpu_custom_call.1} parent=1 // loop_exit
      _
    %1743 = vsyncpa [#allocation3], 1
    %s1744 = scalar_lea.sflag [#allocation3], 1
    %1745 = vsyncpa %s1744, 1
    %1746 = vsyncpa [#allocation6], 1
    %1747 = vsyncpa [#allocation9], 1
    %1748 = vsyncpa [#allocation4], 1
    %s1749 = scalar_lea.sflag [#allocation4], 1
    %1750 = vsyncpa %s1749, 1
    %1751 = vsyncpa [#allocation12], 1
    %s1752 = scalar_lea.sflag [#allocation12], 1
    %1753 = vsyncpa %s1752, 1
    %1754 = vsyncpa [#allocation15], 1
    %s1755 = scalar_lea.sflag [#allocation15], 1
    %1756 = vsyncpa %s1755, 1

</llo_original>
